<compile_context>
chip_gen: v6e
topology: v6e:2x2x1
jax: 0.10.0
libtpu: 0.0.40
codegen_flags: <defaults>
</compile_context>

<pallas_src>
import jax
import jax.numpy as jnp
from jax.experimental import pallas as pl
from jax.experimental.pallas import tpu as pltpu


# ---------------------------------------------------------------------------
# Static helpers (trace-time constants; folded by XLA under jit)
# ---------------------------------------------------------------------------
def _interp_matrix(n_in, n_out):
    """Row-interpolation matrix R [n_out, n_in] for bilinear upsampling with
    align_corners=True (matches nn.Upsample(mode='bilinear', align_corners=True))."""
    if n_in == 1:
        return jnp.ones((n_out, 1), jnp.float32)
    src = (jnp.arange(n_out, dtype=jnp.float32) * (n_in - 1)) / (n_out - 1)
    i0 = jnp.minimum(jnp.floor(src).astype(jnp.int32), n_in - 1)
    i1 = jnp.minimum(i0 + 1, n_in - 1)
    frac = src - i0.astype(jnp.float32)
    return (jax.nn.one_hot(i0, n_in, dtype=jnp.float32) * (1.0 - frac)[:, None]
            + jax.nn.one_hot(i1, n_in, dtype=jnp.float32) * frac[:, None])


def _tap_masks(B, Ho, Wo):
    """[9, B*Ho*Wo] 0/1 masks: tap (ky,kx) is valid at output (h,w) iff the
    shifted source pixel lies inside the image (emulates zero padding=1 and
    kills cross-row / cross-batch lane-shift contamination)."""
    h = jnp.arange(Ho)
    w = jnp.arange(Wo)
    rows = []
    for ky in range(3):
        for kx in range(3):
            mh = (h + ky - 1 >= 0) & (h + ky - 1 < Ho)
            mw = (w + kx - 1 >= 0) & (w + kx - 1 < Wo)
            m = (mh[:, None] & mw[None, :]).astype(jnp.float32).reshape(-1)
            rows.append(jnp.tile(m, B))
    return jnp.stack(rows, axis=0)


# ---------------------------------------------------------------------------
# Fused kernel
# ---------------------------------------------------------------------------
def _make_up_kernel(B, Ho, Wo, C1, C2, Cmid, Cout):
    Cin = C1 + C2
    HW = Ho * Wo
    L = B * HW
    P = Wo + 1            # max |tap shift| = Wo + 1
    Lpad = L + 2 * P

    def kernel(x1_ref, x2_ref, ubd_ref, mask_ref,
               w1_ref, g1_ref, b1_ref, w2_ref, g2_ref, b2_ref,
               out_ref, xpad1, xpad2, stack1, stack2):
        # All activations are [C, lanes] with the lane axis = flat (b, h, w).
        masks = mask_ref[...]                                        # [9, L]

        # --- bilinear upsample of x1 (single matmul against block-diagonal
        #     interpolation matrix) + channel concat with x2, written into a
        #     zero-padded, lane-dense activation scratch.
        xpad1[...] = jnp.zeros_like(xpad1)
        x1_up = jnp.dot(x1_ref[...], ubd_ref[...],
                        preferred_element_type=jnp.float32)          # [C1, L]
        xpad1[0:C2, P:P + L] = x2_ref[...]                           # cat([x2, x1_up])
        xpad1[C2:Cin, P:P + L] = x1_up

        def conv_bn_relu(xpad, stack, C, w_ref, g_ref, b_ref):
            # 3x3 taps as lane-shifted reads of the padded activation;
            # border taps are masked (zero padding). Build the im2col stack
            # once in VMEM, then ONE channel-contraction matmul.
            for ky in range(3):
                for kx in range(3):
                    t = ky * 3 + kx
                    s = (ky - 1) * Wo + (kx - 1)
                    tap = xpad[:, P + s:P + s + L] * masks[t:t + 1, :]
                    stack[t * C:(t + 1) * C, :] = tap
            y = jnp.dot(w_ref[...], stack[...],
                        preferred_element_type=jnp.float32)          # [Co, L]
            # BatchNorm2d forward (training mode): biased batch stats over
            # (N, H, W) == the lane axis here. rsqrt -> EUP slot.
            mean = jnp.mean(y, axis=1, keepdims=True)
            var = jnp.mean((y - mean) ** 2, axis=1, keepdims=True)
            y = (y - mean) * jax.lax.rsqrt(var + 1e-5)
            y = y * g_ref[...] + b_ref[...]
            return jnp.maximum(y, 0.0)                               # ReLU

        h1 = conv_bn_relu(xpad1, stack1, Cin, w1_ref, g1_ref, b1_ref)

        xpad2[...] = jnp.zeros_like(xpad2)
        xpad2[:, P:P + L] = h1
        y2 = conv_bn_relu(xpad2, stack2, Cmid, w2_ref, g2_ref, b2_ref)

        # Lane-dense, NCHW-flattened output store: [Cout, B*H*W].
        out_ref[...] = y2.astype(out_ref.dtype)

    return kernel, Lpad


# ---------------------------------------------------------------------------
# Wrapper
# ---------------------------------------------------------------------------
def up_forward(x1_nchw, x2_nchw, params):
    """Forward of Up(bilinear=True). Inputs/outputs in NCHW like PyTorch."""
    B, C1, Hi, Wi = x1_nchw.shape
    B2, C2, Ho, Wo = x2_nchw.shape
    assert B2 == B and Ho == 2 * Hi and Wo == 2 * Wi
    Cin = C1 + C2
    Cmid = params["w1"].shape[-1]
    Cout = params["w2"].shape[-1]
    HW = Ho * Wo
    L = B * HW

    # Channel-major layout with flat (batch, spatial) in lanes.
    x1_cb = jnp.transpose(x1_nchw, (1, 0, 2, 3)).reshape(C1, B * Hi * Wi)
    x2_cb = jnp.transpose(x2_nchw, (1, 0, 2, 3)).reshape(C2, L)

    # align_corners=True bilinear x2 upsample expressed as one matmul:
    # [C1, B*Hi*Wi] @ kron(I_B, kron(Rh, Rw)^T) -> [C1, B*Ho*Wo].
    r_h = _interp_matrix(Hi, Ho)
    r_w = _interp_matrix(Wi, Wo)
    m2d = jnp.kron(r_h, r_w)                                   # [HW, Hi*Wi]
    ubd = jnp.kron(jnp.eye(B, dtype=jnp.float32), m2d.T)       # [B*Hi*Wi, L]

    mask9 = _tap_masks(B, Ho, Wo)                              # [9, L]

    # Conv weights as a single im2col matrix per stage: [Cout, 9*Cin].
    w1_mat = params["w1"].reshape(9 * Cin, Cmid).T
    w2_mat = params["w2"].reshape(9 * Cmid, Cout).T
    g1 = params["g1"].reshape(Cmid, 1)
    b1 = params["b1"].reshape(Cmid, 1)
    g2 = params["g2"].reshape(Cout, 1)
    b2 = params["b2"].reshape(Cout, 1)

    kernel, Lpad = _make_up_kernel(B, Ho, Wo, C1, C2, Cmid, Cout)

    vmem = pltpu.MemorySpace.VMEM
    out = pl.pallas_call(
        kernel,
        out_shape=jax.ShapeDtypeStruct((Cout, L), x1_nchw.dtype),
        in_specs=[pl.BlockSpec(memory_space=vmem)] * 10,
        out_specs=pl.BlockSpec(memory_space=vmem),
        scratch_shapes=[
            pltpu.VMEM((Cin, Lpad), jnp.float32),    # padded conv1 input
            pltpu.VMEM((Cmid, Lpad), jnp.float32),   # padded conv2 input
            pltpu.VMEM((9 * Cin, L), jnp.float32),   # im2col stack, conv1
            pltpu.VMEM((9 * Cmid, L), jnp.float32),  # im2col stack, conv2
        ],
    )(x1_cb, x2_cb, ubd, mask9, w1_mat, g1, b1, w2_mat, g2, b2)

    # [Cout, B*Ho*Wo] (lane-dense NCHW-flattened) -> NCHW.
    return jnp.transpose(out.reshape(Cout, B, Ho, Wo), (1, 0, 2, 3))


# ---------------------------------------------------------------------------
# Params + plain-JAX reference (for the numerics check)
# ---------------------------------------------------------------------------
def init_up_params(key, in_channels, out_channels):
    """Deterministic params for Up(in_channels, out_channels, bilinear=True)."""
    mid_channels = in_channels // 2
    k1, k2 = jax.random.split(key)
    # Conv weights stored as [kh, kw, Cin, Cout] (PyTorch is [Cout, Cin, kh, kw]).
    w1 = 0.1 * jax.random.normal(k1, (3, 3, in_channels, mid_channels), jnp.float32)
    w2 = 0.1 * jax.random.normal(k2, (3, 3, mid_channels, out_channels), jnp.float32)
    g1 = jnp.ones((mid_channels,), jnp.float32)
    b1 = jnp.zeros((mid_channels,), jnp.float32)
    g2 = jnp.ones((out_channels,), jnp.float32)
    b2 = jnp.zeros((out_channels,), jnp.float32)
    return dict(w1=w1, g1=g1, b1=b1, w2=w2, g2=g2, b2=b2)


def up_reference(x1_nchw, x2_nchw, params):
    """Plain-JAX (non-Pallas) reference of the PyTorch module forward."""
    B, C1, Hi, Wi = x1_nchw.shape
    Ho, Wo = 2 * Hi, 2 * Wi
    r_h = _interp_matrix(Hi, Ho)
    r_w = _interp_matrix(Wi, Wo)
    x1_up = jnp.einsum("hH,bcHW,wW->bchw", r_h, x1_nchw, r_w)
    x = jnp.concatenate([x2_nchw, x1_up], axis=1)

    def conv_bn_relu(x, w, g, b):
        y = jax.lax.conv_general_dilated(
            x, w, window_strides=(1, 1), padding=((1, 1), (1, 1)),
            dimension_numbers=("NCHW", "HWIO", "NCHW"))
        mean = jnp.mean(y, axis=(0, 2, 3), keepdims=True)
        var = jnp.mean((y - mean) ** 2, axis=(0, 2, 3), keepdims=True)
        y = (y - mean) * jax.lax.rsqrt(var + 1e-5)
        y = y * g.reshape(1, -1, 1, 1) + b.reshape(1, -1, 1, 1)
        return jnp.maximum(y, 0.0)

    y = conv_bn_relu(x, params["w1"], params["g1"], params["b1"])
    y = conv_bn_relu(y, params["w2"], params["g2"], params["b2"])
    return y


if __name__ == "__main__":
    key = jax.random.PRNGKey(0)
    k_x1, k_x2, k_p = jax.random.split(key, 3)

    B = 2
    C1 = 4          # channels of x1 (to be upsampled)
    C2 = 4          # channels of x2 (skip connection)
    Hi = Wi = 8     # x1 spatial; x2 spatial is 2Hi x 2Wi
    in_channels = C1 + C2   # 8
    out_channels = 4

    x1 = jax.random.normal(k_x1, (B, C1, Hi, Wi), jnp.float32)          # [2, 4, 8, 8]
    x2 = jax.random.normal(k_x2, (B, C2, 2 * Hi, 2 * Wi), jnp.float32)  # [2, 4, 16, 16]
    params = init_up_params(k_p, in_channels, out_channels)

    out = jax.jit(up_forward)(x1, x2, params)
    out = jax.block_until_ready(out)

    assert out.shape == (B, out_channels, 2 * Hi, 2 * Wi), out.shape
    assert bool(jnp.all(jnp.isfinite(out)))

    ref = up_reference(x1, x2, params)
    max_err = float(jnp.max(jnp.abs(out - ref)))
    assert max_err < 5e-2, f"max abs diff vs plain-JAX reference: {max_err}"

    print("KERNEL_OK")
</pallas_src>

<mosaic_0001>
module attributes {stable_mosaic.version = 11 : i64} {
  func.func @kernel(%arg0: memref<4x128xf32, #tpu.memory_space<vmem>>, %arg1: memref<4x512xf32, #tpu.memory_space<vmem>>, %arg2: memref<128x512xf32, #tpu.memory_space<vmem>>, %arg3: memref<9x512xf32, #tpu.memory_space<vmem>>, %arg4: memref<4x72xf32, #tpu.memory_space<vmem>>, %arg5: memref<4x1xf32, #tpu.memory_space<vmem>>, %arg6: memref<4x1xf32, #tpu.memory_space<vmem>>, %arg7: memref<4x36xf32, #tpu.memory_space<vmem>>, %arg8: memref<4x1xf32, #tpu.memory_space<vmem>>, %arg9: memref<4x1xf32, #tpu.memory_space<vmem>>, %arg10: memref<4x512xf32, #tpu.memory_space<vmem>>, %arg11: memref<8x546xf32, #tpu.memory_space<vmem>>, %arg12: memref<4x546xf32, #tpu.memory_space<vmem>>, %arg13: memref<72x512xf32, #tpu.memory_space<vmem>>, %arg14: memref<36x512xf32, #tpu.memory_space<vmem>>) attributes {dimension_semantics = [], scalar_prefetch = 0 : i64, scratch_operands = 4 : i64, tpu.core_type = #tpu.core_type<tc>} {
    %c0 = arith.constant 0 : index
    %c0_0 = arith.constant 0 : index
    %0 = vector.load %arg3[%c0, %c0_0] : memref<9x512xf32, #tpu.memory_space<vmem>>, vector<9x512xf32>
    %cst = arith.constant 0.000000e+00 : f32
    %1 = vector.broadcast %cst : f32 to vector<8x546xf32>
    %c0_1 = arith.constant 0 : index
    %c0_2 = arith.constant 0 : index
    %2 = vector.load %arg11[%c0_1, %c0_2] : memref<8x546xf32, #tpu.memory_space<vmem>>, vector<8x546xf32>
    tpu.vector_store %arg11[%c0_1, %c0_2], %1 {strides = array<i32>} : memref<8x546xf32, #tpu.memory_space<vmem>>, vector<8x546xf32>,
    %c0_3 = arith.constant 0 : index
    %c0_4 = arith.constant 0 : index
    %3 = vector.load %arg0[%c0_3, %c0_4] : memref<4x128xf32, #tpu.memory_space<vmem>>, vector<4x128xf32>
    %c0_5 = arith.constant 0 : index
    %c0_6 = arith.constant 0 : index
    %4 = vector.load %arg2[%c0_5, %c0_6] : memref<128x512xf32, #tpu.memory_space<vmem>>, vector<128x512xf32>
    %cst_7 = arith.constant dense<0.000000e+00> : vector<4x512xf32>
    %5 = tpu.matmul %3, %4, %cst_7 {dimension_numbers = #tpu.dot_dimension_numbers<[1], [0], [0], [1], [0, 0, 1, 1], [], []>} : vector<4x128xf32>, vector<128x512xf32>, vector<4x512xf32> -> vector<4x512xf32>
    %c0_8 = arith.constant 0 : index
    %c0_9 = arith.constant 0 : index
    %6 = vector.load %arg1[%c0_8, %c0_9] : memref<4x512xf32, #tpu.memory_space<vmem>>, vector<4x512xf32>
    %c0_10 = arith.constant 0 : index
    %c17 = arith.constant 17 : index
    %7 = vector.load %arg11[%c0_10, %c17] : memref<8x546xf32, #tpu.memory_space<vmem>>, vector<4x512xf32>
    tpu.vector_store %arg11[%c0_10, %c17], %6 {strides = array<i32>} : memref<8x546xf32, #tpu.memory_space<vmem>>, vector<4x512xf32>,
    %c4 = arith.constant 4 : index
    %c17_11 = arith.constant 17 : index
    %8 = vector.load %arg11[%c4, %c17_11] : memref<8x546xf32, #tpu.memory_space<vmem>>, vector<4x512xf32>
    tpu.vector_store %arg11[%c4, %c17_11], %5 {strides = array<i32>} : memref<8x546xf32, #tpu.memory_space<vmem>>, vector<4x512xf32>,
    %c0_12 = arith.constant 0 : index
    %c0_13 = arith.constant 0 : index
    %9 = vector.load %arg11[%c0_12, %c0_13] : memref<8x546xf32, #tpu.memory_space<vmem>>, vector<8x512xf32>
    %10 = vector.extract_strided_slice %0 {offsets = [0, 0], sizes = [1, 512], strides = [1, 1]} : vector<9x512xf32> to vector<1x512xf32>
    %11 = vector.broadcast %10 : vector<1x512xf32> to vector<8x512xf32>
    %12 = arith.mulf %9, %11 : vector<8x512xf32>
    %c0_14 = arith.constant 0 : index
    %c0_15 = arith.constant 0 : index
    %13 = vector.load %arg13[%c0_14, %c0_15] : memref<72x512xf32, #tpu.memory_space<vmem>>, vector<8x512xf32>
    tpu.vector_store %arg13[%c0_14, %c0_15], %12 {strides = array<i32>} : memref<72x512xf32, #tpu.memory_space<vmem>>, vector<8x512xf32>,
    %c0_16 = arith.constant 0 : index
    %c1 = arith.constant 1 : index
    %14 = vector.load %arg11[%c0_16, %c1] : memref<8x546xf32, #tpu.memory_space<vmem>>, vector<8x512xf32>
    %15 = vector.extract_strided_slice %0 {offsets = [1, 0], sizes = [1, 512], strides = [1, 1]} : vector<9x512xf32> to vector<1x512xf32>
    %16 = vector.broadcast %15 : vector<1x512xf32> to vector<8x512xf32>
    %17 = arith.mulf %14, %16 : vector<8x512xf32>
    %c8 = arith.constant 8 : index
    %c0_17 = arith.constant 0 : index
    %18 = vector.load %arg13[%c8, %c0_17] : memref<72x512xf32, #tpu.memory_space<vmem>>, vector<8x512xf32>
    tpu.vector_store %arg13[%c8, %c0_17], %17 {strides = array<i32>} : memref<72x512xf32, #tpu.memory_space<vmem>>, vector<8x512xf32>,
    %c0_18 = arith.constant 0 : index
    %c2 = arith.constant 2 : index
    %19 = vector.load %arg11[%c0_18, %c2] : memref<8x546xf32, #tpu.memory_space<vmem>>, vector<8x512xf32>
    %20 = vector.extract_strided_slice %0 {offsets = [2, 0], sizes = [1, 512], strides = [1, 1]} : vector<9x512xf32> to vector<1x512xf32>
    %21 = vector.broadcast %20 : vector<1x512xf32> to vector<8x512xf32>
    %22 = arith.mulf %19, %21 : vector<8x512xf32>
    %c16 = arith.constant 16 : index
    %c0_19 = arith.constant 0 : index
    %23 = vector.load %arg13[%c16, %c0_19] : memref<72x512xf32, #tpu.memory_space<vmem>>, vector<8x512xf32>
    tpu.vector_store %arg13[%c16, %c0_19], %22 {strides = array<i32>} : memref<72x512xf32, #tpu.memory_space<vmem>>, vector<8x512xf32>,
    %c0_20 = arith.constant 0 : index
    %c16_21 = arith.constant 16 : index
    %24 = vector.load %arg11[%c0_20, %c16_21] : memref<8x546xf32, #tpu.memory_space<vmem>>, vector<8x512xf32>
    %25 = vector.extract_strided_slice %0 {offsets = [3, 0], sizes = [1, 512], strides = [1, 1]} : vector<9x512xf32> to vector<1x512xf32>
    %26 = vector.broadcast %25 : vector<1x512xf32> to vector<8x512xf32>
    %27 = arith.mulf %24, %26 : vector<8x512xf32>
    %c24 = arith.constant 24 : index
    %c0_22 = arith.constant 0 : index
    %28 = vector.load %arg13[%c24, %c0_22] : memref<72x512xf32, #tpu.memory_space<vmem>>, vector<8x512xf32>
    tpu.vector_store %arg13[%c24, %c0_22], %27 {strides = array<i32>} : memref<72x512xf32, #tpu.memory_space<vmem>>, vector<8x512xf32>,
    %c0_23 = arith.constant 0 : index
    %c17_24 = arith.constant 17 : index
    %29 = vector.load %arg11[%c0_23, %c17_24] : memref<8x546xf32, #tpu.memory_space<vmem>>, vector<8x512xf32>
    %30 = vector.extract_strided_slice %0 {offsets = [4, 0], sizes = [1, 512], strides = [1, 1]} : vector<9x512xf32> to vector<1x512xf32>
    %31 = vector.broadcast %30 : vector<1x512xf32> to vector<8x512xf32>
    %32 = arith.mulf %29, %31 : vector<8x512xf32>
    %c32 = arith.constant 32 : index
    %c0_25 = arith.constant 0 : index
    %33 = vector.load %arg13[%c32, %c0_25] : memref<72x512xf32, #tpu.memory_space<vmem>>, vector<8x512xf32>
    tpu.vector_store %arg13[%c32, %c0_25], %32 {strides = array<i32>} : memref<72x512xf32, #tpu.memory_space<vmem>>, vector<8x512xf32>,
    %c0_26 = arith.constant 0 : index
    %c18 = arith.constant 18 : index
    %34 = vector.load %arg11[%c0_26, %c18] : memref<8x546xf32, #tpu.memory_space<vmem>>, vector<8x512xf32>
    %35 = vector.extract_strided_slice %0 {offsets = [5, 0], sizes = [1, 512], strides = [1, 1]} : vector<9x512xf32> to vector<1x512xf32>
    %36 = vector.broadcast %35 : vector<1x512xf32> to vector<8x512xf32>
    %37 = arith.mulf %34, %36 : vector<8x512xf32>
    %c40 = arith.constant 40 : index
    %c0_27 = arith.constant 0 : index
    %38 = vector.load %arg13[%c40, %c0_27] : memref<72x512xf32, #tpu.memory_space<vmem>>, vector<8x512xf32>
    tpu.vector_store %arg13[%c40, %c0_27], %37 {strides = array<i32>} : memref<72x512xf32, #tpu.memory_space<vmem>>, vector<8x512xf32>,
    %c0_28 = arith.constant 0 : index
    %c32_29 = arith.constant 32 : index
    %39 = vector.load %arg11[%c0_28, %c32_29] : memref<8x546xf32, #tpu.memory_space<vmem>>, vector<8x512xf32>
    %40 = vector.extract_strided_slice %0 {offsets = [6, 0], sizes = [1, 512], strides = [1, 1]} : vector<9x512xf32> to vector<1x512xf32>
    %41 = vector.broadcast %40 : vector<1x512xf32> to vector<8x512xf32>
    %42 = arith.mulf %39, %41 : vector<8x512xf32>
    %c48 = arith.constant 48 : index
    %c0_30 = arith.constant 0 : index
    %43 = vector.load %arg13[%c48, %c0_30] : memref<72x512xf32, #tpu.memory_space<vmem>>, vector<8x512xf32>
    tpu.vector_store %arg13[%c48, %c0_30], %42 {strides = array<i32>} : memref<72x512xf32, #tpu.memory_space<vmem>>, vector<8x512xf32>,
    %c0_31 = arith.constant 0 : index
    %c33 = arith.constant 33 : index
    %44 = vector.load %arg11[%c0_31, %c33] : memref<8x546xf32, #tpu.memory_space<vmem>>, vector<8x512xf32>
    %45 = vector.extract_strided_slice %0 {offsets = [7, 0], sizes = [1, 512], strides = [1, 1]} : vector<9x512xf32> to vector<1x512xf32>
    %46 = vector.broadcast %45 : vector<1x512xf32> to vector<8x512xf32>
    %47 = arith.mulf %44, %46 : vector<8x512xf32>
    %c56 = arith.constant 56 : index
    %c0_32 = arith.constant 0 : index
    %48 = vector.load %arg13[%c56, %c0_32] : memref<72x512xf32, #tpu.memory_space<vmem>>, vector<8x512xf32>
    tpu.vector_store %arg13[%c56, %c0_32], %47 {strides = array<i32>} : memref<72x512xf32, #tpu.memory_space<vmem>>, vector<8x512xf32>,
    %c0_33 = arith.constant 0 : index
    %c34 = arith.constant 34 : index
    %49 = vector.load %arg11[%c0_33, %c34] : memref<8x546xf32, #tpu.memory_space<vmem>>, vector<8x512xf32>
    %50 = vector.extract_strided_slice %0 {offsets = [8, 0], sizes = [1, 512], strides = [1, 1]} : vector<9x512xf32> to vector<1x512xf32>
    %51 = vector.broadcast %50 : vector<1x512xf32> to vector<8x512xf32>
    %52 = arith.mulf %49, %51 : vector<8x512xf32>
    %c64 = arith.constant 64 : index
    %c0_34 = arith.constant 0 : index
    %53 = vector.load %arg13[%c64, %c0_34] : memref<72x512xf32, #tpu.memory_space<vmem>>, vector<8x512xf32>
    tpu.vector_store %arg13[%c64, %c0_34], %52 {strides = array<i32>} : memref<72x512xf32, #tpu.memory_space<vmem>>, vector<8x512xf32>,
    %c0_35 = arith.constant 0 : index
    %c0_36 = arith.constant 0 : index
    %54 = vector.load %arg4[%c0_35, %c0_36] : memref<4x72xf32, #tpu.memory_space<vmem>>, vector<4x72xf32>
    %c0_37 = arith.constant 0 : index
    %c0_38 = arith.constant 0 : index
    %55 = vector.load %arg13[%c0_37, %c0_38] : memref<72x512xf32, #tpu.memory_space<vmem>>, vector<72x512xf32>
    %cst_39 = arith.constant dense<0.000000e+00> : vector<4x512xf32>
    %56 = tpu.matmul %54, %55, %cst_39 {dimension_numbers = #tpu.dot_dimension_numbers<[1], [0], [0], [1], [0, 0, 1, 1], [], []>} : vector<4x72xf32>, vector<72x512xf32>, vector<4x512xf32> -> vector<4x512xf32>
    %cst_40 = arith.constant dense<0.000000e+00> : vector<4xf32>
    %57 = vector.multi_reduction <add>, %56, %cst_40 [1] : vector<4x512xf32> to vector<4xf32>
    %58 = vector.shape_cast %57 : vector<4xf32> to vector<4x1xf32>
    %cst_41 = arith.constant 5.120000e+02 : f32
    %59 = vector.broadcast %cst_41 : f32 to vector<4x1xf32>
    %60 = arith.divf %58, %59 : vector<4x1xf32>
    %61 = vector.broadcast %60 : vector<4x1xf32> to vector<4x512xf32>
    %62 = arith.subf %56, %61 : vector<4x512xf32>
    %63 = arith.mulf %62, %62 : vector<4x512xf32>
    %cst_42 = arith.constant dense<0.000000e+00> : vector<4xf32>
    %64 = vector.multi_reduction <add>, %63, %cst_42 [1] : vector<4x512xf32> to vector<4xf32>
    %65 = vector.shape_cast %64 : vector<4xf32> to vector<4x1xf32>
    %cst_43 = arith.constant 5.120000e+02 : f32
    %66 = vector.broadcast %cst_43 : f32 to vector<4x1xf32>
    %67 = arith.divf %65, %66 : vector<4x1xf32>
    %68 = vector.broadcast %60 : vector<4x1xf32> to vector<4x512xf32>
    %69 = arith.subf %56, %68 : vector<4x512xf32>
    %cst_44 = arith.constant 9.99999974E-6 : f32
    %70 = vector.broadcast %cst_44 : f32 to vector<4x1xf32>
    %71 = arith.addf %67, %70 : vector<4x1xf32>
    %72 = math.rsqrt %71 : vector<4x1xf32>
    %73 = vector.broadcast %72 : vector<4x1xf32> to vector<4x512xf32>
    %74 = arith.mulf %69, %73 : vector<4x512xf32>
    %c0_45 = arith.constant 0 : index
    %c0_46 = arith.constant 0 : index
    %75 = vector.load %arg5[%c0_45, %c0_46] : memref<4x1xf32, #tpu.memory_space<vmem>>, vector<4x1xf32>
    %76 = vector.broadcast %75 : vector<4x1xf32> to vector<4x512xf32>
    %77 = arith.mulf %74, %76 : vector<4x512xf32>
    %c0_47 = arith.constant 0 : index
    %c0_48 = arith.constant 0 : index
    %78 = vector.load %arg6[%c0_47, %c0_48] : memref<4x1xf32, #tpu.memory_space<vmem>>, vector<4x1xf32>
    %79 = vector.broadcast %78 : vector<4x1xf32> to vector<4x512xf32>
    %80 = arith.addf %77, %79 : vector<4x512xf32>
    %cst_49 = arith.constant 0.000000e+00 : f32
    %81 = vector.broadcast %cst_49 : f32 to vector<4x512xf32>
    %82 = arith.maximumf %80, %81 : vector<4x512xf32>
    %cst_50 = arith.constant 0.000000e+00 : f32
    %83 = vector.broadcast %cst_50 : f32 to vector<4x546xf32>
    %c0_51 = arith.constant 0 : index
    %c0_52 = arith.constant 0 : index
    %84 = vector.load %arg12[%c0_51, %c0_52] : memref<4x546xf32, #tpu.memory_space<vmem>>, vector<4x546xf32>
    tpu.vector_store %arg12[%c0_51, %c0_52], %83 {strides = array<i32>} : memref<4x546xf32, #tpu.memory_space<vmem>>, vector<4x546xf32>,
    %c0_53 = arith.constant 0 : index
    %c17_54 = arith.constant 17 : index
    %85 = vector.load %arg12[%c0_53, %c17_54] : memref<4x546xf32, #tpu.memory_space<vmem>>, vector<4x512xf32>
    tpu.vector_store %arg12[%c0_53, %c17_54], %82 {strides = array<i32>} : memref<4x546xf32, #tpu.memory_space<vmem>>, vector<4x512xf32>,
    %c0_55 = arith.constant 0 : index
    %c0_56 = arith.constant 0 : index
    %86 = vector.load %arg12[%c0_55, %c0_56] : memref<4x546xf32, #tpu.memory_space<vmem>>, vector<4x512xf32>
    %87 = vector.extract_strided_slice %0 {offsets = [0, 0], sizes = [1, 512], strides = [1, 1]} : vector<9x512xf32> to vector<1x512xf32>
    %88 = vector.broadcast %87 : vector<1x512xf32> to vector<4x512xf32>
    %89 = arith.mulf %86, %88 : vector<4x512xf32>
    %c0_57 = arith.constant 0 : index
    %c0_58 = arith.constant 0 : index
    %90 = vector.load %arg14[%c0_57, %c0_58] : memref<36x512xf32, #tpu.memory_space<vmem>>, vector<4x512xf32>
    tpu.vector_store %arg14[%c0_57, %c0_58], %89 {strides = array<i32>} : memref<36x512xf32, #tpu.memory_space<vmem>>, vector<4x512xf32>,
    %c0_59 = arith.constant 0 : index
    %c1_60 = arith.constant 1 : index
    %91 = vector.load %arg12[%c0_59, %c1_60] : memref<4x546xf32, #tpu.memory_space<vmem>>, vector<4x512xf32>
    %92 = vector.extract_strided_slice %0 {offsets = [1, 0], sizes = [1, 512], strides = [1, 1]} : vector<9x512xf32> to vector<1x512xf32>
    %93 = vector.broadcast %92 : vector<1x512xf32> to vector<4x512xf32>
    %94 = arith.mulf %91, %93 : vector<4x512xf32>
    %c4_61 = arith.constant 4 : index
    %c0_62 = arith.constant 0 : index
    %95 = vector.load %arg14[%c4_61, %c0_62] : memref<36x512xf32, #tpu.memory_space<vmem>>, vector<4x512xf32>
    tpu.vector_store %arg14[%c4_61, %c0_62], %94 {strides = array<i32>} : memref<36x512xf32, #tpu.memory_space<vmem>>, vector<4x512xf32>,
    %c0_63 = arith.constant 0 : index
    %c2_64 = arith.constant 2 : index
    %96 = vector.load %arg12[%c0_63, %c2_64] : memref<4x546xf32, #tpu.memory_space<vmem>>, vector<4x512xf32>
    %97 = vector.extract_strided_slice %0 {offsets = [2, 0], sizes = [1, 512], strides = [1, 1]} : vector<9x512xf32> to vector<1x512xf32>
    %98 = vector.broadcast %97 : vector<1x512xf32> to vector<4x512xf32>
    %99 = arith.mulf %96, %98 : vector<4x512xf32>
    %c8_65 = arith.constant 8 : index
    %c0_66 = arith.constant 0 : index
    %100 = vector.load %arg14[%c8_65, %c0_66] : memref<36x512xf32, #tpu.memory_space<vmem>>, vector<4x512xf32>
    tpu.vector_store %arg14[%c8_65, %c0_66], %99 {strides = array<i32>} : memref<36x512xf32, #tpu.memory_space<vmem>>, vector<4x512xf32>,
    %c0_67 = arith.constant 0 : index
    %c16_68 = arith.constant 16 : index
    %101 = vector.load %arg12[%c0_67, %c16_68] : memref<4x546xf32, #tpu.memory_space<vmem>>, vector<4x512xf32>
    %102 = vector.extract_strided_slice %0 {offsets = [3, 0], sizes = [1, 512], strides = [1, 1]} : vector<9x512xf32> to vector<1x512xf32>
    %103 = vector.broadcast %102 : vector<1x512xf32> to vector<4x512xf32>
    %104 = arith.mulf %101, %103 : vector<4x512xf32>
    %c12 = arith.constant 12 : index
    %c0_69 = arith.constant 0 : index
    %105 = vector.load %arg14[%c12, %c0_69] : memref<36x512xf32, #tpu.memory_space<vmem>>, vector<4x512xf32>
    tpu.vector_store %arg14[%c12, %c0_69], %104 {strides = array<i32>} : memref<36x512xf32, #tpu.memory_space<vmem>>, vector<4x512xf32>,
    %c0_70 = arith.constant 0 : index
    %c17_71 = arith.constant 17 : index
    %106 = vector.load %arg12[%c0_70, %c17_71] : memref<4x546xf32, #tpu.memory_space<vmem>>, vector<4x512xf32>
    %107 = vector.extract_strided_slice %0 {offsets = [4, 0], sizes = [1, 512], strides = [1, 1]} : vector<9x512xf32> to vector<1x512xf32>
    %108 = vector.broadcast %107 : vector<1x512xf32> to vector<4x512xf32>
    %109 = arith.mulf %106, %108 : vector<4x512xf32>
    %c16_72 = arith.constant 16 : index
    %c0_73 = arith.constant 0 : index
    %110 = vector.load %arg14[%c16_72, %c0_73] : memref<36x512xf32, #tpu.memory_space<vmem>>, vector<4x512xf32>
    tpu.vector_store %arg14[%c16_72, %c0_73], %109 {strides = array<i32>} : memref<36x512xf32, #tpu.memory_space<vmem>>, vector<4x512xf32>,
    %c0_74 = arith.constant 0 : index
    %c18_75 = arith.constant 18 : index
    %111 = vector.load %arg12[%c0_74, %c18_75] : memref<4x546xf32, #tpu.memory_space<vmem>>, vector<4x512xf32>
    %112 = vector.extract_strided_slice %0 {offsets = [5, 0], sizes = [1, 512], strides = [1, 1]} : vector<9x512xf32> to vector<1x512xf32>
    %113 = vector.broadcast %112 : vector<1x512xf32> to vector<4x512xf32>
    %114 = arith.mulf %111, %113 : vector<4x512xf32>
    %c20 = arith.constant 20 : index
    %c0_76 = arith.constant 0 : index
    %115 = vector.load %arg14[%c20, %c0_76] : memref<36x512xf32, #tpu.memory_space<vmem>>, vector<4x512xf32>
    tpu.vector_store %arg14[%c20, %c0_76], %114 {strides = array<i32>} : memref<36x512xf32, #tpu.memory_space<vmem>>, vector<4x512xf32>,
    %c0_77 = arith.constant 0 : index
    %c32_78 = arith.constant 32 : index
    %116 = vector.load %arg12[%c0_77, %c32_78] : memref<4x546xf32, #tpu.memory_space<vmem>>, vector<4x512xf32>
    %117 = vector.extract_strided_slice %0 {offsets = [6, 0], sizes = [1, 512], strides = [1, 1]} : vector<9x512xf32> to vector<1x512xf32>
    %118 = vector.broadcast %117 : vector<1x512xf32> to vector<4x512xf32>
    %119 = arith.mulf %116, %118 : vector<4x512xf32>
    %c24_79 = arith.constant 24 : index
    %c0_80 = arith.constant 0 : index
    %120 = vector.load %arg14[%c24_79, %c0_80] : memref<36x512xf32, #tpu.memory_space<vmem>>, vector<4x512xf32>
    tpu.vector_store %arg14[%c24_79, %c0_80], %119 {strides = array<i32>} : memref<36x512xf32, #tpu.memory_space<vmem>>, vector<4x512xf32>,
    %c0_81 = arith.constant 0 : index
    %c33_82 = arith.constant 33 : index
    %121 = vector.load %arg12[%c0_81, %c33_82] : memref<4x546xf32, #tpu.memory_space<vmem>>, vector<4x512xf32>
    %122 = vector.extract_strided_slice %0 {offsets = [7, 0], sizes = [1, 512], strides = [1, 1]} : vector<9x512xf32> to vector<1x512xf32>
    %123 = vector.broadcast %122 : vector<1x512xf32> to vector<4x512xf32>
    %124 = arith.mulf %121, %123 : vector<4x512xf32>
    %c28 = arith.constant 28 : index
    %c0_83 = arith.constant 0 : index
    %125 = vector.load %arg14[%c28, %c0_83] : memref<36x512xf32, #tpu.memory_space<vmem>>, vector<4x512xf32>
    tpu.vector_store %arg14[%c28, %c0_83], %124 {strides = array<i32>} : memref<36x512xf32, #tpu.memory_space<vmem>>, vector<4x512xf32>,
    %c0_84 = arith.constant 0 : index
    %c34_85 = arith.constant 34 : index
    %126 = vector.load %arg12[%c0_84, %c34_85] : memref<4x546xf32, #tpu.memory_space<vmem>>, vector<4x512xf32>
    %127 = vector.extract_strided_slice %0 {offsets = [8, 0], sizes = [1, 512], strides = [1, 1]} : vector<9x512xf32> to vector<1x512xf32>
    %128 = vector.broadcast %127 : vector<1x512xf32> to vector<4x512xf32>
    %129 = arith.mulf %126, %128 : vector<4x512xf32>
    %c32_86 = arith.constant 32 : index
    %c0_87 = arith.constant 0 : index
    %130 = vector.load %arg14[%c32_86, %c0_87] : memref<36x512xf32, #tpu.memory_space<vmem>>, vector<4x512xf32>
    tpu.vector_store %arg14[%c32_86, %c0_87], %129 {strides = array<i32>} : memref<36x512xf32, #tpu.memory_space<vmem>>, vector<4x512xf32>,
    %c0_88 = arith.constant 0 : index
    %c0_89 = arith.constant 0 : index
    %131 = vector.load %arg7[%c0_88, %c0_89] : memref<4x36xf32, #tpu.memory_space<vmem>>, vector<4x36xf32>
    %c0_90 = arith.constant 0 : index
    %c0_91 = arith.constant 0 : index
    %132 = vector.load %arg14[%c0_90, %c0_91] : memref<36x512xf32, #tpu.memory_space<vmem>>, vector<36x512xf32>
    %cst_92 = arith.constant dense<0.000000e+00> : vector<4x512xf32>
    %133 = tpu.matmul %131, %132, %cst_92 {dimension_numbers = #tpu.dot_dimension_numbers<[1], [0], [0], [1], [0, 0, 1, 1], [], []>} : vector<4x36xf32>, vector<36x512xf32>, vector<4x512xf32> -> vector<4x512xf32>
    %cst_93 = arith.constant dense<0.000000e+00> : vector<4xf32>
    %134 = vector.multi_reduction <add>, %133, %cst_93 [1] : vector<4x512xf32> to vector<4xf32>
    %135 = vector.shape_cast %134 : vector<4xf32> to vector<4x1xf32>
    %cst_94 = arith.constant 5.120000e+02 : f32
    %136 = vector.broadcast %cst_94 : f32 to vector<4x1xf32>
    %137 = arith.divf %135, %136 : vector<4x1xf32>
    %138 = vector.broadcast %137 : vector<4x1xf32> to vector<4x512xf32>
    %139 = arith.subf %133, %138 : vector<4x512xf32>
    %140 = arith.mulf %139, %139 : vector<4x512xf32>
    %cst_95 = arith.constant dense<0.000000e+00> : vector<4xf32>
    %141 = vector.multi_reduction <add>, %140, %cst_95 [1] : vector<4x512xf32> to vector<4xf32>
    %142 = vector.shape_cast %141 : vector<4xf32> to vector<4x1xf32>
    %cst_96 = arith.constant 5.120000e+02 : f32
    %143 = vector.broadcast %cst_96 : f32 to vector<4x1xf32>
    %144 = arith.divf %142, %143 : vector<4x1xf32>
    %145 = vector.broadcast %137 : vector<4x1xf32> to vector<4x512xf32>
    %146 = arith.subf %133, %145 : vector<4x512xf32>
    %cst_97 = arith.constant 9.99999974E-6 : f32
    %147 = vector.broadcast %cst_97 : f32 to vector<4x1xf32>
    %148 = arith.addf %144, %147 : vector<4x1xf32>
    %149 = math.rsqrt %148 : vector<4x1xf32>
    %150 = vector.broadcast %149 : vector<4x1xf32> to vector<4x512xf32>
    %151 = arith.mulf %146, %150 : vector<4x512xf32>
    %c0_98 = arith.constant 0 : index
    %c0_99 = arith.constant 0 : index
    %152 = vector.load %arg8[%c0_98, %c0_99] : memref<4x1xf32, #tpu.memory_space<vmem>>, vector<4x1xf32>
    %153 = vector.broadcast %152 : vector<4x1xf32> to vector<4x512xf32>
    %154 = arith.mulf %151, %153 : vector<4x512xf32>
    %c0_100 = arith.constant 0 : index
    %c0_101 = arith.constant 0 : index
    %155 = vector.load %arg9[%c0_100, %c0_101] : memref<4x1xf32, #tpu.memory_space<vmem>>, vector<4x1xf32>
    %156 = vector.broadcast %155 : vector<4x1xf32> to vector<4x512xf32>
    %157 = arith.addf %154, %156 : vector<4x512xf32>
    %cst_102 = arith.constant 0.000000e+00 : f32
    %158 = vector.broadcast %cst_102 : f32 to vector<4x512xf32>
    %159 = arith.maximumf %157, %158 : vector<4x512xf32>
    %c0_103 = arith.constant 0 : index
    %c0_104 = arith.constant 0 : index
    %160 = vector.load %arg10[%c0_103, %c0_104] : memref<4x512xf32, #tpu.memory_space<vmem>>, vector<4x512xf32>
    tpu.vector_store %arg10[%c0_103, %c0_104], %159 {strides = array<i32>} : memref<4x512xf32, #tpu.memory_space<vmem>>, vector<4x512xf32>,
    return
  }
}

</mosaic_0001>

<llo_original>
// kernel: up_forward.1
$region0: #{up_forward.1}
  #allocation0 [shape = 'u32[]', space=smem, size = 0x4, offset = 0x4, fixed_abs, tag = 'smem constant byte address 0x4 - core index']
  #allocation1 [shape = 'u32[144,128]{1,0:T(1,128)}', space=vmem, size = 0x12000, scoped, tag = 'internal scratch']
  #allocation2 [shape = 'f32[8,546]{1,0:T(8,128)}', space=vmem, size = 0x5000, scoped, tag = 'scratch operand']
  #allocation3 [shape = 'f32[4,546]{1,0:T(4,128)}', space=vmem, size = 0x2800, scoped, tag = 'scratch operand']
  #allocation4 [shape = 'f32[72,512]{1,0:T(8,128)}', space=vmem, size = 0x24000, scoped, tag = 'scratch operand']
  #allocation5 [shape = 'f32[36,512]{1,0:T(8,128)}', space=vmem, size = 0x14000, scoped, tag = 'scratch operand']
  %s0 = inlined_call_operand.vmem [shape: f32[4,128], index: 0, kind: input, shape index: {}]
  %s1 = inlined_call_operand.vmem [shape: f32[4,512], index: 1, kind: input, shape index: {}]
  %s2 = inlined_call_operand.vmem [shape: f32[128,512], index: 2, kind: input, shape index: {}]
  %s3 = inlined_call_operand.vmem [shape: f32[9,512], index: 3, kind: input, shape index: {}]
  %s4 = inlined_call_operand.vmem [shape: f32[4,72], index: 4, kind: input, shape index: {}]
  %s5 = inlined_call_operand.vmem [shape: f32[4,1], index: 5, kind: input, shape index: {}]
  %s6 = inlined_call_operand.vmem [shape: f32[4,1], index: 6, kind: input, shape index: {}]
  %s7 = inlined_call_operand.vmem [shape: f32[4,36], index: 7, kind: input, shape index: {}]
  %s8 = inlined_call_operand.vmem [shape: f32[4,1], index: 8, kind: input, shape index: {}]
  %s9 = inlined_call_operand.vmem [shape: f32[4,1], index: 9, kind: input, shape index: {}]
  %s10 = inlined_call_operand.vmem [shape: f32[4,512], index: 10, kind: output, shape index: {}]
  %s11 = sld [smem:[#allocation0]]
  $region50: #{up_forward.1} parent=0
    _
  %s13 = ssub.s32 1, %s11
  %s14 = scalar_select 0, %s13, %s11
  // Predicated region
  $region2: #{up_forward.1} parent=0 // pred_check
    _
  $region3: #{up_forward.1} parent=0 // pred_check_branch
    %16 = sbr.rel (0) target = $region5
  $region4: #{up_forward.1} parent=0 // pred_region
    _
  $region5: #{up_forward.1} parent=0 // pred_fallthru
    _
  // Predicated region
  $region6: #{up_forward.1} parent=0 // pred_check
    _
  $region7: #{up_forward.1} parent=0 // pred_check_branch
    %18 = sbr.rel (0) target = $region9
  $region8: #{up_forward.1} parent=0 // pred_region
    _
  $region9: #{up_forward.1} parent=0 // pred_fallthru
    _
  // Predicated region
  $region10: #{up_forward.1} parent=0 // pred_check
    _
  $region11: #{up_forward.1} parent=0 // pred_check_branch
    %20 = sbr.rel (0) target = $region13
  $region12: #{up_forward.1} parent=0 // pred_region
    _
  $region13: #{up_forward.1} parent=0 // pred_fallthru
    _
  // Predicated region
  $region14: #{up_forward.1} parent=0 // pred_check
    _
  $region15: #{up_forward.1} parent=0 // pred_check_branch
    %22 = sbr.rel (0) target = $region17
  $region16: #{up_forward.1} parent=0 // pred_region
    _
  $region17: #{up_forward.1} parent=0 // pred_fallthru
    _
  // Predicated region
  $region18: #{up_forward.1} parent=0 // pred_check
    _
  $region19: #{up_forward.1} parent=0 // pred_check_branch
    %24 = sbr.rel (0) target = $region21
  $region20: #{up_forward.1} parent=0 // pred_region
    _
  $region21: #{up_forward.1} parent=0 // pred_fallthru
    _
  // Predicated region
  $region22: #{up_forward.1} parent=0 // pred_check
    _
  $region23: #{up_forward.1} parent=0 // pred_check_branch
    %26 = sbr.rel (0) target = $region25
  $region24: #{up_forward.1} parent=0 // pred_region
    _
  $region25: #{up_forward.1} parent=0 // pred_fallthru
    _
  // Predicated region
  $region26: #{up_forward.1} parent=0 // pred_check
    _
  $region27: #{up_forward.1} parent=0 // pred_check_branch
    %28 = sbr.rel (0) target = $region29
  $region28: #{up_forward.1} parent=0 // pred_region
    _
  $region29: #{up_forward.1} parent=0 // pred_fallthru
    _
  // Predicated region
  $region30: #{up_forward.1} parent=0 // pred_check
    _
  $region31: #{up_forward.1} parent=0 // pred_check_branch
    %30 = sbr.rel (0) target = $region33
  $region32: #{up_forward.1} parent=0 // pred_region
    _
  $region33: #{up_forward.1} parent=0 // pred_fallthru
    _
  // Predicated region
  $region34: #{up_forward.1} parent=0 // pred_check
    _
  $region35: #{up_forward.1} parent=0 // pred_check_branch
    %32 = sbr.rel (0) target = $region37
  $region36: #{up_forward.1} parent=0 // pred_region
    _
  $region37: #{up_forward.1} parent=0 // pred_fallthru
    _
  // Predicated region
  $region38: #{up_forward.1} parent=0 // pred_check
    _
  $region39: #{up_forward.1} parent=0 // pred_check_branch
    %34 = sbr.rel (0) target = $region41
  $region40: #{up_forward.1} parent=0 // pred_region
    _
  $region41: #{up_forward.1} parent=0 // pred_fallthru
    _
  %v35 = vld [vmem:[%s3] sm:$0xff]
  %v36 = vld [vmem:[%s3 + $0x8] sm:$0xff]
  %v37 = vld [vmem:[%s3 + $0x10] sm:$0xff]
  %v38 = vld [vmem:[%s3 + $0x18] sm:$0xff]
  %v39 = vld [vmem:[%s3 + $0x20] sm:$0x1]
  %v40 = vld [vmem:[%s3 + $0x28] sm:$0x1]
  %v41 = vld [vmem:[%s3 + $0x30] sm:$0x1]
  %v42 = vld [vmem:[%s3 + $0x38] sm:$0x1]
  %43 = vst [vmem:[#allocation2] sm:$0xff] 0.0
  %44 = vst [vmem:[#allocation2 + $0x8] sm:$0xff] 0.0
  %45 = vst [vmem:[#allocation2 + $0x10] sm:$0xff] 0.0
  %46 = vst [vmem:[#allocation2 + $0x18] sm:$0xff] 0.0
  %vm47 = vcmask 277504
  %48 = vst.msk [vmem:[#allocation2 + $0x20] sm:$0xff] %vm47, 0.0
  %v49 = vld [vmem:[%s0] sm:$0xf]
  %v50 = vld [vmem:[%s2] sm:$0xff]
  %v51 = vld [vmem:[%s2 + $0x8] sm:$0xff]
  %v52 = vld [vmem:[%s2 + $0x10] sm:$0xff]
  %v53 = vld [vmem:[%s2 + $0x18] sm:$0xff]
  %v54 = vld [vmem:[%s2 + $0x20] sm:$0xff]
  %v55 = vld [vmem:[%s2 + $0x28] sm:$0xff]
  %v56 = vld [vmem:[%s2 + $0x30] sm:$0xff]
  %v57 = vld [vmem:[%s2 + $0x38] sm:$0xff]
  %v58 = vld [vmem:[%s2 + $0x40] sm:$0xff]
  %v59 = vld [vmem:[%s2 + $0x48] sm:$0xff]
  %v60 = vld [vmem:[%s2 + $0x50] sm:$0xff]
  %v61 = vld [vmem:[%s2 + $0x58] sm:$0xff]
  %v62 = vld [vmem:[%s2 + $0x60] sm:$0xff]
  %v63 = vld [vmem:[%s2 + $0x68] sm:$0xff]
  %v64 = vld [vmem:[%s2 + $0x70] sm:$0xff]
  %v65 = vld [vmem:[%s2 + $0x78] sm:$0xff]
  %v66 = vld [vmem:[%s2 + $0x80] sm:$0xff]
  %v67 = vld [vmem:[%s2 + $0x88] sm:$0xff]
  %v68 = vld [vmem:[%s2 + $0x90] sm:$0xff]
  %v69 = vld [vmem:[%s2 + $0x98] sm:$0xff]
  %v70 = vld [vmem:[%s2 + $0xa0] sm:$0xff]
  %v71 = vld [vmem:[%s2 + $0xa8] sm:$0xff]
  %v72 = vld [vmem:[%s2 + $0xb0] sm:$0xff]
  %v73 = vld [vmem:[%s2 + $0xb8] sm:$0xff]
  %v74 = vld [vmem:[%s2 + $0xc0] sm:$0xff]
  %v75 = vld [vmem:[%s2 + $0xc8] sm:$0xff]
  %v76 = vld [vmem:[%s2 + $0xd0] sm:$0xff]
  %v77 = vld [vmem:[%s2 + $0xd8] sm:$0xff]
  %v78 = vld [vmem:[%s2 + $0xe0] sm:$0xff]
  %v79 = vld [vmem:[%s2 + $0xe8] sm:$0xff]
  %v80 = vld [vmem:[%s2 + $0xf0] sm:$0xff]
  %v81 = vld [vmem:[%s2 + $0xf8] sm:$0xff]
  %v82 = vld [vmem:[%s2 + $0x100] sm:$0xff]
  %v83 = vld [vmem:[%s2 + $0x108] sm:$0xff]
  %v84 = vld [vmem:[%s2 + $0x110] sm:$0xff]
  %v85 = vld [vmem:[%s2 + $0x118] sm:$0xff]
  %v86 = vld [vmem:[%s2 + $0x120] sm:$0xff]
  %v87 = vld [vmem:[%s2 + $0x128] sm:$0xff]
  %v88 = vld [vmem:[%s2 + $0x130] sm:$0xff]
  %v89 = vld [vmem:[%s2 + $0x138] sm:$0xff]
  %v90 = vld [vmem:[%s2 + $0x140] sm:$0xff]
  %v91 = vld [vmem:[%s2 + $0x148] sm:$0xff]
  %v92 = vld [vmem:[%s2 + $0x150] sm:$0xff]
  %v93 = vld [vmem:[%s2 + $0x158] sm:$0xff]
  %v94 = vld [vmem:[%s2 + $0x160] sm:$0xff]
  %v95 = vld [vmem:[%s2 + $0x168] sm:$0xff]
  %v96 = vld [vmem:[%s2 + $0x170] sm:$0xff]
  %v97 = vld [vmem:[%s2 + $0x178] sm:$0xff]
  %v98 = vld [vmem:[%s2 + $0x180] sm:$0xff]
  %v99 = vld [vmem:[%s2 + $0x188] sm:$0xff]
  %v100 = vld [vmem:[%s2 + $0x190] sm:$0xff]
  %v101 = vld [vmem:[%s2 + $0x198] sm:$0xff]
  %v102 = vld [vmem:[%s2 + $0x1a0] sm:$0xff]
  %v103 = vld [vmem:[%s2 + $0x1a8] sm:$0xff]
  %v104 = vld [vmem:[%s2 + $0x1b0] sm:$0xff]
  %v105 = vld [vmem:[%s2 + $0x1b8] sm:$0xff]
  %v106 = vld [vmem:[%s2 + $0x1c0] sm:$0xff]
  %v107 = vld [vmem:[%s2 + $0x1c8] sm:$0xff]
  %v108 = vld [vmem:[%s2 + $0x1d0] sm:$0xff]
  %v109 = vld [vmem:[%s2 + $0x1d8] sm:$0xff]
  %v110 = vld [vmem:[%s2 + $0x1e0] sm:$0xff]
  %v111 = vld [vmem:[%s2 + $0x1e8] sm:$0xff]
  %v112 = vld [vmem:[%s2 + $0x1f0] sm:$0xff]
  %v113 = vld [vmem:[%s2 + $0x1f8] sm:$0xff]
  %114 = vmatprep.subr.mxu0 %v111
  %115 = vmatpush1.msra.mxu0 %v110
  %116 = vmatprep.subr.mxu0 %v107
  %117 = vmatpush1.msra.mxu0 %v106
  %118 = vmatprep.subr.mxu0 %v103
  %119 = vmatpush1.msra.mxu0 %v102
  %120 = vmatprep.subr.mxu0 %v99
  %121 = vmatpush1.msra.mxu0 %v98
  %122 = vmatprep.subr.mxu0 %v95
  %123 = vmatpush1.msra.mxu0 %v94
  %124 = vmatprep.subr.mxu0 %v91
  %125 = vmatpush1.msra.mxu0 %v90
  %126 = vmatprep.subr.mxu0 %v87
  %127 = vmatpush1.msra.mxu0 %v86
  %128 = vmatprep.subr.mxu0 %v83
  %129 = vmatpush1.msra.mxu0 %v82
  %130 = vmatprep.subr.mxu0 %v79
  %131 = vmatpush1.msra.mxu0 %v78
  %132 = vmatprep.subr.mxu0 %v75
  %133 = vmatpush1.msra.mxu0 %v74
  %134 = vmatprep.subr.mxu0 %v71
  %135 = vmatpush1.msra.mxu0 %v70
  %136 = vmatprep.subr.mxu0 %v67
  %137 = vmatpush1.msra.mxu0 %v66
  %138 = vmatprep.subr.mxu0 %v63
  %139 = vmatpush1.msra.mxu0 %v62
  %140 = vmatprep.subr.mxu0 %v59
  %141 = vmatpush1.msra.mxu0 %v58
  %142 = vmatprep.subr.mxu0 %v55
  %143 = vmatpush1.msra.mxu0 %v54
  %144 = vmatprep.subr.mxu0 %v51
  %145 = vmatpush1.msra.mxu0 %v50
  %146 = vmatprep.subr.mxu0 0.0
  %147 = vmatpush2.msra.mxu0 0.0
  %148 = vmatprep.subr.mxu0 0.0
  %149 = vmatpush2.msra.mxu0 0.0
  %150 = vmatprep.subr.mxu0 0.0
  %151 = vmatpush2.msra.mxu0 0.0
  %152 = vmatprep.subr.mxu0 0.0
  %153 = vmatpush2.msra.mxu0 0.0
  %154 = vmatprep.subr.mxu0 0.0
  %155 = vmatpush2.msra.mxu0 0.0
  %156 = vmatprep.subr.mxu0 0.0
  %157 = vmatpush2.msra.mxu0 0.0
  %158 = vmatprep.subr.mxu0 0.0
  %159 = vmatpush2.msra.mxu0 0.0
  %160 = vmatprep.subr.mxu0 0.0
  %161 = vmatpush2.msra.mxu0 0.0
  %162 = vmatprep.subr.mxu0 0.0
  %163 = vmatpush2.msra.mxu0 0.0
  %164 = vmatprep.subr.mxu0 0.0
  %165 = vmatpush2.msra.mxu0 0.0
  %166 = vmatprep.subr.mxu0 0.0
  %167 = vmatpush2.msra.mxu0 0.0
  %168 = vmatprep.subr.mxu0 0.0
  %169 = vmatpush2.msra.mxu0 0.0
  %170 = vmatprep.subr.mxu0 0.0
  %171 = vmatpush2.msra.mxu0 0.0
  %172 = vmatprep.subr.mxu0 0.0
  %173 = vmatpush2.msra.mxu0 0.0
  %174 = vmatprep.subr.mxu0 0.0
  %175 = vmatpush2.msra.mxu0 0.0
  %176 = vmatprep.subr.mxu0 0.0
  %177 = vmatpush2.msra.mxu0 0.0
  %178 = vmatprep.mubr.f32.mxu0 0.0
  %179 = vmatmul.mubr.f32.gmra.mxu0 %v49
  %v180 = vpop.f32.mrf.mxu0
  %v181 = vadd.f32 0.0, %v180
  %v182 = vpop.f32.mrf.mxu0
  %v183 = vadd.f32 0.0, %v182
  %184 = vdwg.mxu0
  %185 = vmatprep.subr.mxu0 %v113
  %186 = vmatpush1.msra.mxu0 %v112
  %187 = vmatprep.subr.mxu0 %v109
  %188 = vmatpush1.msra.mxu0 %v108
  %189 = vmatprep.subr.mxu0 %v105
  %190 = vmatpush1.msra.mxu0 %v104
  %191 = vmatprep.subr.mxu0 %v101
  %192 = vmatpush1.msra.mxu0 %v100
  %193 = vmatprep.subr.mxu0 %v97
  %194 = vmatpush1.msra.mxu0 %v96
  %195 = vmatprep.subr.mxu0 %v93
  %196 = vmatpush1.msra.mxu0 %v92
  %197 = vmatprep.subr.mxu0 %v89
  %198 = vmatpush1.msra.mxu0 %v88
  %199 = vmatprep.subr.mxu0 %v85
  %200 = vmatpush1.msra.mxu0 %v84
  %201 = vmatprep.subr.mxu0 %v81
  %202 = vmatpush1.msra.mxu0 %v80
  %203 = vmatprep.subr.mxu0 %v77
  %204 = vmatpush1.msra.mxu0 %v76
  %205 = vmatprep.subr.mxu0 %v73
  %206 = vmatpush1.msra.mxu0 %v72
  %207 = vmatprep.subr.mxu0 %v69
  %208 = vmatpush1.msra.mxu0 %v68
  %209 = vmatprep.subr.mxu0 %v65
  %210 = vmatpush1.msra.mxu0 %v64
  %211 = vmatprep.subr.mxu0 %v61
  %212 = vmatpush1.msra.mxu0 %v60
  %213 = vmatprep.subr.mxu0 %v57
  %214 = vmatpush1.msra.mxu0 %v56
  %215 = vmatprep.subr.mxu0 %v53
  %216 = vmatpush1.msra.mxu0 %v52
  %217 = vmatprep.subr.mxu0 0.0
  %218 = vmatpush2.msra.mxu0 0.0
  %219 = vmatprep.subr.mxu0 0.0
  %220 = vmatpush2.msra.mxu0 0.0
  %221 = vmatprep.subr.mxu0 0.0
  %222 = vmatpush2.msra.mxu0 0.0
  %223 = vmatprep.subr.mxu0 0.0
  %224 = vmatpush2.msra.mxu0 0.0
  %225 = vmatprep.subr.mxu0 0.0
  %226 = vmatpush2.msra.mxu0 0.0
  %227 = vmatprep.subr.mxu0 0.0
  %228 = vmatpush2.msra.mxu0 0.0
  %229 = vmatprep.subr.mxu0 0.0
  %230 = vmatpush2.msra.mxu0 0.0
  %231 = vmatprep.subr.mxu0 0.0
  %232 = vmatpush2.msra.mxu0 0.0
  %233 = vmatprep.subr.mxu0 0.0
  %234 = vmatpush2.msra.mxu0 0.0
  %235 = vmatprep.subr.mxu0 0.0
  %236 = vmatpush2.msra.mxu0 0.0
  %237 = vmatprep.subr.mxu0 0.0
  %238 = vmatpush2.msra.mxu0 0.0
  %239 = vmatprep.subr.mxu0 0.0
  %240 = vmatpush2.msra.mxu0 0.0
  %241 = vmatprep.subr.mxu0 0.0
  %242 = vmatpush2.msra.mxu0 0.0
  %243 = vmatprep.subr.mxu0 0.0
  %244 = vmatpush2.msra.mxu0 0.0
  %245 = vmatprep.subr.mxu0 0.0
  %246 = vmatpush2.msra.mxu0 0.0
  %247 = vmatprep.subr.mxu0 0.0
  %248 = vmatpush2.msra.mxu0 0.0
  %249 = vmatprep.mubr.f32.mxu0 0.0
  %250 = vmatmul.mubr.f32.gmra.mxu0 %v49
  %v251 = vpop.f32.mrf.mxu0
  %v252 = vadd.f32 0.0, %v251
  %v253 = vpop.f32.mrf.mxu0
  %v254 = vadd.f32 0.0, %v253
  %255 = vdwg.mxu0
  %v256 = vld [vmem:[%s1] sm:$0xff]
  %v257 = vld [vmem:[%s1 + $0x8] sm:$0xff]
  %v260 = vcombine.high %v256, %v256
  %v261 = vcombine.high %v257, %v257
  %262 = vrot.lane.b32.xlu0 %v256, 17
  %v263 = vpop.permute.xlu0 %262
  %264 = vrot.lane.b32.xlu0 %v260, 17
  %v265 = vpop.permute.xlu0 %264
  %266 = vrot.lane.b32.xlu0 %v257, 17
  %v267 = vpop.permute.xlu0 %266
  %268 = vrot.lane.b32.xlu0 %v261, 17
  %v269 = vpop.permute.xlu0 %268
  %vm270 = vcmask 138240
  %v271 = vsel %vm270, %v263, %v265
  %v272 = vsel %vm270, %v265, %v267
  %v273 = vsel %vm270, %v267, %v269
  %vm279 = vcmask 1043592
  %280 = vst.msk [vmem:[#allocation2] sm:$0xf] %vm279, %v263
  %281 = vst [vmem:[#allocation2 + $0x8] sm:$0xf] %v271
  %282 = vst [vmem:[#allocation2 + $0x10] sm:$0xf] %v272
  %283 = vst [vmem:[#allocation2 + $0x18] sm:$0xf] %v273
  %vm284 = vcmask 134144
  %285 = vst.msk [vmem:[#allocation2 + $0x20] sm:$0xf] %vm284, %v269
  %v290 = vrot.slane %v181, 4
  %v291 = vrot.slane %v183, 4
  %v292 = vrot.slane %v252, 4
  %v293 = vrot.slane %v254, 4
  %294 = vrot.lane.b32.xlu0 %v290, 17
  %v295 = vpop.permute.xlu0 %294
  %296 = vrot.lane.b32.xlu0 %v291, 17
  %v297 = vpop.permute.xlu0 %296
  %298 = vrot.lane.b32.xlu0 %v292, 17
  %v299 = vpop.permute.xlu0 %298
  %300 = vrot.lane.b32.xlu0 %v293, 17
  %v301 = vpop.permute.xlu0 %300
  %v302 = vsel %vm270, %v295, %v297
  %v303 = vsel %vm270, %v297, %v299
  %v304 = vsel %vm270, %v299, %v301
  %vm310 = vcmask 1047692
  %311 = vst.msk [vmem:[#allocation2] sm:$0xf0] %vm310, %v295
  %312 = vst [vmem:[#allocation2 + $0x8] sm:$0xf0] %v302
  %313 = vst [vmem:[#allocation2 + $0x10] sm:$0xf0] %v303
  %314 = vst [vmem:[#allocation2 + $0x18] sm:$0xf0] %v304
  %vm315 = vcmask 138244
  %316 = vst.msk [vmem:[#allocation2 + $0x20] sm:$0xf0] %vm315, %v301
  %v317 = vld [vmem:[#allocation2] sm:$0xff]
  %v318 = vld [vmem:[#allocation2 + $0x8] sm:$0xff]
  %v319 = vld [vmem:[#allocation2 + $0x10] sm:$0xff]
  %v320 = vld [vmem:[#allocation2 + $0x18] sm:$0xff]
  %v321 = vlaneseq
  %v322 = vshrl.u32 %v321, 7
  %v323 = vsub.s32 0, %v322
  %v324 = vrot.slane %v35, %v323
  %v325 = vlaneseq
  %v326 = vshrl.u32 %v325, 7
  %v327 = vsub.s32 0, %v326
  %v328 = vrot.slane %v36, %v327
  %v329 = vlaneseq
  %v330 = vshrl.u32 %v329, 7
  %v331 = vsub.s32 0, %v330
  %v332 = vrot.slane %v37, %v331
  %v333 = vlaneseq
  %v334 = vshrl.u32 %v333, 7
  %v335 = vsub.s32 0, %v334
  %v336 = vrot.slane %v38, %v335
  %v337 = vmul.f32 %v317, %v324
  %v338 = vmul.f32 %v318, %v328
  %v339 = vmul.f32 %v319, %v332
  %v340 = vmul.f32 %v320, %v336
  %341 = vst [vmem:[#allocation4] sm:$0xff] %v337
  %342 = vst [vmem:[#allocation4 + $0x8] sm:$0xff] %v338
  %343 = vst [vmem:[#allocation4 + $0x10] sm:$0xff] %v339
  %344 = vst [vmem:[#allocation4 + $0x18] sm:$0xff] %v340
  %v345 = vld [vmem:[#allocation2] sm:$0xff]
  %v346 = vld [vmem:[#allocation2 + $0x8] sm:$0xff]
  %v347 = vld [vmem:[#allocation2 + $0x10] sm:$0xff]
  %v348 = vld [vmem:[#allocation2 + $0x18] sm:$0xff]
  %v349 = vld [vmem:[#allocation2 + $0x20] sm:$0xff]
  %v350 = vlaneseq
  %v351 = vshrl.u32 %v350, 7
  %v352 = vsub.s32 1, %v351
  %v353 = vrot.slane %v35, %v352
  %v354 = vlaneseq
  %v355 = vshrl.u32 %v354, 7
  %v356 = vsub.s32 1, %v355
  %v357 = vrot.slane %v36, %v356
  %v358 = vlaneseq
  %v359 = vshrl.u32 %v358, 7
  %v360 = vsub.s32 1, %v359
  %v361 = vrot.slane %v37, %v360
  %v362 = vlaneseq
  %v363 = vshrl.u32 %v362, 7
  %v364 = vsub.s32 1, %v363
  %v365 = vrot.slane %v38, %v364
  %370 = vrot.lane.b32.xlu0 %v353, 1
  %v371 = vpop.permute.xlu0 %370
  %372 = vrot.lane.b32.xlu0 %v357, 1
  %v373 = vpop.permute.xlu0 %372
  %374 = vrot.lane.b32.xlu0 %v361, 1
  %v375 = vpop.permute.xlu0 %374
  %376 = vrot.lane.b32.xlu0 %v365, 1
  %v377 = vpop.permute.xlu0 %376
  %vm378 = vcmask 7168
  %v379 = vsel %vm378, %v371, %v373
  %v380 = vsel %vm378, %v373, %v375
  %v381 = vsel %vm378, %v375, %v377
  %v387 = vmul.f32 %v345, %v371
  %v388 = vmul.f32 %v346, %v379
  %v389 = vmul.f32 %v347, %v380
  %v390 = vmul.f32 %v348, %v381
  %v391 = vmul.f32 %v349, %v377
  %397 = vrot.lane.b32.xlu0 %v387, 127
  %v398 = vpop.permute.xlu0 %397
  %399 = vrot.lane.b32.xlu0 %v388, 127
  %v400 = vpop.permute.xlu0 %399
  %401 = vrot.lane.b32.xlu0 %v389, 127
  %v402 = vpop.permute.xlu0 %401
  %403 = vrot.lane.b32.xlu0 %v390, 127
  %v404 = vpop.permute.xlu0 %403
  %405 = vrot.lane.b32.xlu0 %v391, 127
  %v406 = vpop.permute.xlu0 %405
  %vm407 = vcmask 1039360
  %v408 = vsel %vm407, %v398, %v400
  %v409 = vsel %vm407, %v400, %v402
  %v410 = vsel %vm407, %v402, %v404
  %v411 = vsel %vm407, %v404, %v406
  %416 = vst [vmem:[#allocation4 + $0x20] sm:$0xff] %v408
  %417 = vst [vmem:[#allocation4 + $0x28] sm:$0xff] %v409
  %418 = vst [vmem:[#allocation4 + $0x30] sm:$0xff] %v410
  %419 = vst [vmem:[#allocation4 + $0x38] sm:$0xff] %v411
  %v420 = vld [vmem:[#allocation2] sm:$0xff]
  %v421 = vld [vmem:[#allocation2 + $0x8] sm:$0xff]
  %v422 = vld [vmem:[#allocation2 + $0x10] sm:$0xff]
  %v423 = vld [vmem:[#allocation2 + $0x18] sm:$0xff]
  %v424 = vld [vmem:[#allocation2 + $0x20] sm:$0xff]
  %v425 = vlaneseq
  %v426 = vshrl.u32 %v425, 7
  %v427 = vsub.s32 2, %v426
  %v428 = vrot.slane %v35, %v427
  %v429 = vlaneseq
  %v430 = vshrl.u32 %v429, 7
  %v431 = vsub.s32 2, %v430
  %v432 = vrot.slane %v36, %v431
  %v433 = vlaneseq
  %v434 = vshrl.u32 %v433, 7
  %v435 = vsub.s32 2, %v434
  %v436 = vrot.slane %v37, %v435
  %v437 = vlaneseq
  %v438 = vshrl.u32 %v437, 7
  %v439 = vsub.s32 2, %v438
  %v440 = vrot.slane %v38, %v439
  %445 = vrot.lane.b32.xlu0 %v428, 2
  %v446 = vpop.permute.xlu0 %445
  %447 = vrot.lane.b32.xlu0 %v432, 2
  %v448 = vpop.permute.xlu0 %447
  %449 = vrot.lane.b32.xlu0 %v436, 2
  %v450 = vpop.permute.xlu0 %449
  %451 = vrot.lane.b32.xlu0 %v440, 2
  %v452 = vpop.permute.xlu0 %451
  %vm453 = vcmask 15360
  %v454 = vsel %vm453, %v446, %v448
  %v455 = vsel %vm453, %v448, %v450
  %v456 = vsel %vm453, %v450, %v452
  %v462 = vmul.f32 %v420, %v446
  %v463 = vmul.f32 %v421, %v454
  %v464 = vmul.f32 %v422, %v455
  %v465 = vmul.f32 %v423, %v456
  %v466 = vmul.f32 %v424, %v452
  %472 = vrot.lane.b32.xlu0 %v462, 126
  %v473 = vpop.permute.xlu0 %472
  %474 = vrot.lane.b32.xlu0 %v463, 126
  %v475 = vpop.permute.xlu0 %474
  %476 = vrot.lane.b32.xlu0 %v464, 126
  %v477 = vpop.permute.xlu0 %476
  %478 = vrot.lane.b32.xlu0 %v465, 126
  %v479 = vpop.permute.xlu0 %478
  %480 = vrot.lane.b32.xlu0 %v466, 126
  %v481 = vpop.permute.xlu0 %480
  %vm482 = vcmask 1031168
  %v483 = vsel %vm482, %v473, %v475
  %v484 = vsel %vm482, %v475, %v477
  %v485 = vsel %vm482, %v477, %v479
  %v486 = vsel %vm482, %v479, %v481
  %491 = vst [vmem:[#allocation4 + $0x40] sm:$0xff] %v483
  %492 = vst [vmem:[#allocation4 + $0x48] sm:$0xff] %v484
  %493 = vst [vmem:[#allocation4 + $0x50] sm:$0xff] %v485
  %494 = vst [vmem:[#allocation4 + $0x58] sm:$0xff] %v486
  %v495 = vld [vmem:[#allocation2] sm:$0xff]
  %v496 = vld [vmem:[#allocation2 + $0x8] sm:$0xff]
  %v497 = vld [vmem:[#allocation2 + $0x10] sm:$0xff]
  %v498 = vld [vmem:[#allocation2 + $0x18] sm:$0xff]
  %v499 = vld [vmem:[#allocation2 + $0x20] sm:$0xff]
  %v500 = vlaneseq
  %v501 = vshrl.u32 %v500, 7
  %v502 = vsub.s32 3, %v501
  %v503 = vrot.slane %v35, %v502
  %v504 = vlaneseq
  %v505 = vshrl.u32 %v504, 7
  %v506 = vsub.s32 3, %v505
  %v507 = vrot.slane %v36, %v506
  %v508 = vlaneseq
  %v509 = vshrl.u32 %v508, 7
  %v510 = vsub.s32 3, %v509
  %v511 = vrot.slane %v37, %v510
  %v512 = vlaneseq
  %v513 = vshrl.u32 %v512, 7
  %v514 = vsub.s32 3, %v513
  %v515 = vrot.slane %v38, %v514
  %520 = vrot.lane.b32.xlu0 %v503, 16
  %v521 = vpop.permute.xlu0 %520
  %522 = vrot.lane.b32.xlu0 %v507, 16
  %v523 = vpop.permute.xlu0 %522
  %524 = vrot.lane.b32.xlu0 %v511, 16
  %v525 = vpop.permute.xlu0 %524
  %526 = vrot.lane.b32.xlu0 %v515, 16
  %v527 = vpop.permute.xlu0 %526
  %vm528 = vcmask 130048
  %v529 = vsel %vm528, %v521, %v523
  %v530 = vsel %vm528, %v523, %v525
  %v531 = vsel %vm528, %v525, %v527
  %v537 = vmul.f32 %v495, %v521
  %v538 = vmul.f32 %v496, %v529
  %v539 = vmul.f32 %v497, %v530
  %v540 = vmul.f32 %v498, %v531
  %v541 = vmul.f32 %v499, %v527
  %547 = vrot.lane.b32.xlu0 %v537, 112
  %v548 = vpop.permute.xlu0 %547
  %549 = vrot.lane.b32.xlu0 %v538, 112
  %v550 = vpop.permute.xlu0 %549
  %551 = vrot.lane.b32.xlu0 %v539, 112
  %v552 = vpop.permute.xlu0 %551
  %553 = vrot.lane.b32.xlu0 %v540, 112
  %v554 = vpop.permute.xlu0 %553
  %555 = vrot.lane.b32.xlu0 %v541, 112
  %v556 = vpop.permute.xlu0 %555
  %vm557 = vcmask 916480
  %v558 = vsel %vm557, %v548, %v550
  %v559 = vsel %vm557, %v550, %v552
  %v560 = vsel %vm557, %v552, %v554
  %v561 = vsel %vm557, %v554, %v556
  %566 = vst [vmem:[#allocation4 + $0x60] sm:$0xff] %v558
  %567 = vst [vmem:[#allocation4 + $0x68] sm:$0xff] %v559
  %568 = vst [vmem:[#allocation4 + $0x70] sm:$0xff] %v560
  %569 = vst [vmem:[#allocation4 + $0x78] sm:$0xff] %v561
  %v570 = vld [vmem:[#allocation2] sm:$0xff]
  %v571 = vld [vmem:[#allocation2 + $0x8] sm:$0xff]
  %v572 = vld [vmem:[#allocation2 + $0x10] sm:$0xff]
  %v573 = vld [vmem:[#allocation2 + $0x18] sm:$0xff]
  %v574 = vld [vmem:[#allocation2 + $0x20] sm:$0xff]
  %v575 = vlaneseq
  %v576 = vshrl.u32 %v575, 7
  %v577 = vsub.s32 4, %v576
  %v578 = vrot.slane %v35, %v577
  %v579 = vlaneseq
  %v580 = vshrl.u32 %v579, 7
  %v581 = vsub.s32 4, %v580
  %v582 = vrot.slane %v36, %v581
  %v583 = vlaneseq
  %v584 = vshrl.u32 %v583, 7
  %v585 = vsub.s32 4, %v584
  %v586 = vrot.slane %v37, %v585
  %v587 = vlaneseq
  %v588 = vshrl.u32 %v587, 7
  %v589 = vsub.s32 4, %v588
  %v590 = vrot.slane %v38, %v589
  %595 = vrot.lane.b32.xlu0 %v578, 17
  %v596 = vpop.permute.xlu0 %595
  %597 = vrot.lane.b32.xlu0 %v582, 17
  %v598 = vpop.permute.xlu0 %597
  %599 = vrot.lane.b32.xlu0 %v586, 17
  %v600 = vpop.permute.xlu0 %599
  %601 = vrot.lane.b32.xlu0 %v590, 17
  %v602 = vpop.permute.xlu0 %601
  %v603 = vsel %vm270, %v596, %v598
  %v604 = vsel %vm270, %v598, %v600
  %v605 = vsel %vm270, %v600, %v602
  %v611 = vmul.f32 %v570, %v596
  %v612 = vmul.f32 %v571, %v603
  %v613 = vmul.f32 %v572, %v604
  %v614 = vmul.f32 %v573, %v605
  %v615 = vmul.f32 %v574, %v602
  %621 = vrot.lane.b32.xlu0 %v611, 111
  %v622 = vpop.permute.xlu0 %621
  %623 = vrot.lane.b32.xlu0 %v612, 111
  %v624 = vpop.permute.xlu0 %623
  %625 = vrot.lane.b32.xlu0 %v613, 111
  %v626 = vpop.permute.xlu0 %625
  %627 = vrot.lane.b32.xlu0 %v614, 111
  %v628 = vpop.permute.xlu0 %627
  %629 = vrot.lane.b32.xlu0 %v615, 111
  %v630 = vpop.permute.xlu0 %629
  %vm631 = vcmask 908288
  %v632 = vsel %vm631, %v622, %v624
  %v633 = vsel %vm631, %v624, %v626
  %v634 = vsel %vm631, %v626, %v628
  %v635 = vsel %vm631, %v628, %v630
  %640 = vst [vmem:[#allocation4 + $0x80] sm:$0xff] %v632
  %641 = vst [vmem:[#allocation4 + $0x88] sm:$0xff] %v633
  %642 = vst [vmem:[#allocation4 + $0x90] sm:$0xff] %v634
  %643 = vst [vmem:[#allocation4 + $0x98] sm:$0xff] %v635
  %v644 = vld [vmem:[#allocation2] sm:$0xff]
  %v645 = vld [vmem:[#allocation2 + $0x8] sm:$0xff]
  %v646 = vld [vmem:[#allocation2 + $0x10] sm:$0xff]
  %v647 = vld [vmem:[#allocation2 + $0x18] sm:$0xff]
  %v648 = vld [vmem:[#allocation2 + $0x20] sm:$0xff]
  %v649 = vlaneseq
  %v650 = vshrl.u32 %v649, 7
  %v651 = vsub.s32 5, %v650
  %v652 = vrot.slane %v35, %v651
  %v653 = vlaneseq
  %v654 = vshrl.u32 %v653, 7
  %v655 = vsub.s32 5, %v654
  %v656 = vrot.slane %v36, %v655
  %v657 = vlaneseq
  %v658 = vshrl.u32 %v657, 7
  %v659 = vsub.s32 5, %v658
  %v660 = vrot.slane %v37, %v659
  %v661 = vlaneseq
  %v662 = vshrl.u32 %v661, 7
  %v663 = vsub.s32 5, %v662
  %v664 = vrot.slane %v38, %v663
  %669 = vrot.lane.b32.xlu0 %v652, 18
  %v670 = vpop.permute.xlu0 %669
  %671 = vrot.lane.b32.xlu0 %v656, 18
  %v672 = vpop.permute.xlu0 %671
  %673 = vrot.lane.b32.xlu0 %v660, 18
  %v674 = vpop.permute.xlu0 %673
  %675 = vrot.lane.b32.xlu0 %v664, 18
  %v676 = vpop.permute.xlu0 %675
  %vm677 = vcmask 146432
  %v678 = vsel %vm677, %v670, %v672
  %v679 = vsel %vm677, %v672, %v674
  %v680 = vsel %vm677, %v674, %v676
  %v686 = vmul.f32 %v644, %v670
  %v687 = vmul.f32 %v645, %v678
  %v688 = vmul.f32 %v646, %v679
  %v689 = vmul.f32 %v647, %v680
  %v690 = vmul.f32 %v648, %v676
  %696 = vrot.lane.b32.xlu0 %v686, 110
  %v697 = vpop.permute.xlu0 %696
  %698 = vrot.lane.b32.xlu0 %v687, 110
  %v699 = vpop.permute.xlu0 %698
  %700 = vrot.lane.b32.xlu0 %v688, 110
  %v701 = vpop.permute.xlu0 %700
  %702 = vrot.lane.b32.xlu0 %v689, 110
  %v703 = vpop.permute.xlu0 %702
  %704 = vrot.lane.b32.xlu0 %v690, 110
  %v705 = vpop.permute.xlu0 %704
  %vm706 = vcmask 900096
  %v707 = vsel %vm706, %v697, %v699
  %v708 = vsel %vm706, %v699, %v701
  %v709 = vsel %vm706, %v701, %v703
  %v710 = vsel %vm706, %v703, %v705
  %715 = vst [vmem:[#allocation4 + $0xa0] sm:$0xff] %v707
  %716 = vst [vmem:[#allocation4 + $0xa8] sm:$0xff] %v708
  %717 = vst [vmem:[#allocation4 + $0xb0] sm:$0xff] %v709
  %718 = vst [vmem:[#allocation4 + $0xb8] sm:$0xff] %v710
  %v719 = vld [vmem:[#allocation2] sm:$0xff]
  %v720 = vld [vmem:[#allocation2 + $0x8] sm:$0xff]
  %v721 = vld [vmem:[#allocation2 + $0x10] sm:$0xff]
  %v722 = vld [vmem:[#allocation2 + $0x18] sm:$0xff]
  %v723 = vld [vmem:[#allocation2 + $0x20] sm:$0xff]
  %v724 = vlaneseq
  %v725 = vshrl.u32 %v724, 7
  %v726 = vsub.s32 6, %v725
  %v727 = vrot.slane %v35, %v726
  %v728 = vlaneseq
  %v729 = vshrl.u32 %v728, 7
  %v730 = vsub.s32 6, %v729
  %v731 = vrot.slane %v36, %v730
  %v732 = vlaneseq
  %v733 = vshrl.u32 %v732, 7
  %v734 = vsub.s32 6, %v733
  %v735 = vrot.slane %v37, %v734
  %v736 = vlaneseq
  %v737 = vshrl.u32 %v736, 7
  %v738 = vsub.s32 6, %v737
  %v739 = vrot.slane %v38, %v738
  %744 = vrot.lane.b32.xlu0 %v727, 32
  %v745 = vpop.permute.xlu0 %744
  %746 = vrot.lane.b32.xlu0 %v731, 32
  %v747 = vpop.permute.xlu0 %746
  %748 = vrot.lane.b32.xlu0 %v735, 32
  %v749 = vpop.permute.xlu0 %748
  %750 = vrot.lane.b32.xlu0 %v739, 32
  %v751 = vpop.permute.xlu0 %750
  %vm752 = vcmask 261120
  %v753 = vsel %vm752, %v745, %v747
  %v754 = vsel %vm752, %v747, %v749
  %v755 = vsel %vm752, %v749, %v751
  %v761 = vmul.f32 %v719, %v745
  %v762 = vmul.f32 %v720, %v753
  %v763 = vmul.f32 %v721, %v754
  %v764 = vmul.f32 %v722, %v755
  %v765 = vmul.f32 %v723, %v751
  %771 = vrot.lane.b32.xlu0 %v761, 96
  %v772 = vpop.permute.xlu0 %771
  %773 = vrot.lane.b32.xlu0 %v762, 96
  %v774 = vpop.permute.xlu0 %773
  %775 = vrot.lane.b32.xlu0 %v763, 96
  %v776 = vpop.permute.xlu0 %775
  %777 = vrot.lane.b32.xlu0 %v764, 96
  %v778 = vpop.permute.xlu0 %777
  %779 = vrot.lane.b32.xlu0 %v765, 96
  %v780 = vpop.permute.xlu0 %779
  %vm781 = vcmask 785408
  %v782 = vsel %vm781, %v772, %v774
  %v783 = vsel %vm781, %v774, %v776
  %v784 = vsel %vm781, %v776, %v778
  %v785 = vsel %vm781, %v778, %v780
  %790 = vst [vmem:[#allocation4 + $0xc0] sm:$0xff] %v782
  %791 = vst [vmem:[#allocation4 + $0xc8] sm:$0xff] %v783
  %792 = vst [vmem:[#allocation4 + $0xd0] sm:$0xff] %v784
  %793 = vst [vmem:[#allocation4 + $0xd8] sm:$0xff] %v785
  %v794 = vld [vmem:[#allocation2] sm:$0xff]
  %v795 = vld [vmem:[#allocation2 + $0x8] sm:$0xff]
  %v796 = vld [vmem:[#allocation2 + $0x10] sm:$0xff]
  %v797 = vld [vmem:[#allocation2 + $0x18] sm:$0xff]
  %v798 = vld [vmem:[#allocation2 + $0x20] sm:$0xff]
  %v799 = vlaneseq
  %v800 = vshrl.u32 %v799, 7
  %v801 = vsub.s32 7, %v800
  %v802 = vrot.slane %v35, %v801
  %v803 = vlaneseq
  %v804 = vshrl.u32 %v803, 7
  %v805 = vsub.s32 7, %v804
  %v806 = vrot.slane %v36, %v805
  %v807 = vlaneseq
  %v808 = vshrl.u32 %v807, 7
  %v809 = vsub.s32 7, %v808
  %v810 = vrot.slane %v37, %v809
  %v811 = vlaneseq
  %v812 = vshrl.u32 %v811, 7
  %v813 = vsub.s32 7, %v812
  %v814 = vrot.slane %v38, %v813
  %819 = vrot.lane.b32.xlu0 %v802, 33
  %v820 = vpop.permute.xlu0 %819
  %821 = vrot.lane.b32.xlu0 %v806, 33
  %v822 = vpop.permute.xlu0 %821
  %823 = vrot.lane.b32.xlu0 %v810, 33
  %v824 = vpop.permute.xlu0 %823
  %825 = vrot.lane.b32.xlu0 %v814, 33
  %v826 = vpop.permute.xlu0 %825
  %vm827 = vcmask 269312
  %v828 = vsel %vm827, %v820, %v822
  %v829 = vsel %vm827, %v822, %v824
  %v830 = vsel %vm827, %v824, %v826
  %v836 = vmul.f32 %v794, %v820
  %v837 = vmul.f32 %v795, %v828
  %v838 = vmul.f32 %v796, %v829
  %v839 = vmul.f32 %v797, %v830
  %v840 = vmul.f32 %v798, %v826
  %846 = vrot.lane.b32.xlu0 %v836, 95
  %v847 = vpop.permute.xlu0 %846
  %848 = vrot.lane.b32.xlu0 %v837, 95
  %v849 = vpop.permute.xlu0 %848
  %850 = vrot.lane.b32.xlu0 %v838, 95
  %v851 = vpop.permute.xlu0 %850
  %852 = vrot.lane.b32.xlu0 %v839, 95
  %v853 = vpop.permute.xlu0 %852
  %854 = vrot.lane.b32.xlu0 %v840, 95
  %v855 = vpop.permute.xlu0 %854
  %vm856 = vcmask 777216
  %v857 = vsel %vm856, %v847, %v849
  %v858 = vsel %vm856, %v849, %v851
  %v859 = vsel %vm856, %v851, %v853
  %v860 = vsel %vm856, %v853, %v855
  %865 = vst [vmem:[#allocation4 + $0xe0] sm:$0xff] %v857
  %866 = vst [vmem:[#allocation4 + $0xe8] sm:$0xff] %v858
  %867 = vst [vmem:[#allocation4 + $0xf0] sm:$0xff] %v859
  %868 = vst [vmem:[#allocation4 + $0xf8] sm:$0xff] %v860
  %v869 = vld [vmem:[#allocation2] sm:$0xff]
  %v870 = vld [vmem:[#allocation2 + $0x8] sm:$0xff]
  %v871 = vld [vmem:[#allocation2 + $0x10] sm:$0xff]
  %v872 = vld [vmem:[#allocation2 + $0x18] sm:$0xff]
  %v873 = vld [vmem:[#allocation2 + $0x20] sm:$0xff]
  %v874 = vlaneseq
  %v875 = vshrl.u32 %v874, 7
  %v876 = vsub.s32 0, %v875
  %v877 = vrot.slane %v39, %v876
  %v878 = vlaneseq
  %v879 = vshrl.u32 %v878, 7
  %v880 = vsub.s32 0, %v879
  %v881 = vrot.slane %v40, %v880
  %v882 = vlaneseq
  %v883 = vshrl.u32 %v882, 7
  %v884 = vsub.s32 0, %v883
  %v885 = vrot.slane %v41, %v884
  %v886 = vlaneseq
  %v887 = vshrl.u32 %v886, 7
  %v888 = vsub.s32 0, %v887
  %v889 = vrot.slane %v42, %v888
  %894 = vrot.lane.b32.xlu0 %v877, 34
  %v895 = vpop.permute.xlu0 %894
  %896 = vrot.lane.b32.xlu0 %v881, 34
  %v897 = vpop.permute.xlu0 %896
  %898 = vrot.lane.b32.xlu0 %v885, 34
  %v899 = vpop.permute.xlu0 %898
  %900 = vrot.lane.b32.xlu0 %v889, 34
  %v901 = vpop.permute.xlu0 %900
  %v902 = vsel %vm47, %v895, %v897
  %v903 = vsel %vm47, %v897, %v899
  %v904 = vsel %vm47, %v899, %v901
  %v910 = vmul.f32 %v869, %v895
  %v911 = vmul.f32 %v870, %v902
  %v912 = vmul.f32 %v871, %v903
  %v913 = vmul.f32 %v872, %v904
  %v914 = vmul.f32 %v873, %v901
  %920 = vrot.lane.b32.xlu0 %v910, 94
  %v921 = vpop.permute.xlu0 %920
  %922 = vrot.lane.b32.xlu0 %v911, 94
  %v923 = vpop.permute.xlu0 %922
  %924 = vrot.lane.b32.xlu0 %v912, 94
  %v925 = vpop.permute.xlu0 %924
  %926 = vrot.lane.b32.xlu0 %v913, 94
  %v927 = vpop.permute.xlu0 %926
  %928 = vrot.lane.b32.xlu0 %v914, 94
  %v929 = vpop.permute.xlu0 %928
  %vm930 = vcmask 769024
  %v931 = vsel %vm930, %v921, %v923
  %v932 = vsel %vm930, %v923, %v925
  %v933 = vsel %vm930, %v925, %v927
  %v934 = vsel %vm930, %v927, %v929
  %939 = vst [vmem:[#allocation4 + $0x100] sm:$0xff] %v931
  %940 = vst [vmem:[#allocation4 + $0x108] sm:$0xff] %v932
  %941 = vst [vmem:[#allocation4 + $0x110] sm:$0xff] %v933
  %942 = vst [vmem:[#allocation4 + $0x118] sm:$0xff] %v934
  %v943 = vld [vmem:[%s4] sm:$0xf]
  %v944 = vld [vmem:[#allocation4] sm:$0xff]
  %v945 = vld [vmem:[#allocation4 + $0x8] sm:$0xff]
  %v946 = vld [vmem:[#allocation4 + $0x10] sm:$0xff]
  %v947 = vld [vmem:[#allocation4 + $0x18] sm:$0xff]
  %v948 = vld [vmem:[#allocation4 + $0x20] sm:$0xff]
  %v949 = vld [vmem:[#allocation4 + $0x28] sm:$0xff]
  %v950 = vld [vmem:[#allocation4 + $0x30] sm:$0xff]
  %v951 = vld [vmem:[#allocation4 + $0x38] sm:$0xff]
  %v952 = vld [vmem:[#allocation4 + $0x40] sm:$0xff]
  %v953 = vld [vmem:[#allocation4 + $0x48] sm:$0xff]
  %v954 = vld [vmem:[#allocation4 + $0x50] sm:$0xff]
  %v955 = vld [vmem:[#allocation4 + $0x58] sm:$0xff]
  %v956 = vld [vmem:[#allocation4 + $0x60] sm:$0xff]
  %v957 = vld [vmem:[#allocation4 + $0x68] sm:$0xff]
  %v958 = vld [vmem:[#allocation4 + $0x70] sm:$0xff]
  %v959 = vld [vmem:[#allocation4 + $0x78] sm:$0xff]
  %v960 = vld [vmem:[#allocation4 + $0x80] sm:$0xff]
  %v961 = vld [vmem:[#allocation4 + $0x88] sm:$0xff]
  %v962 = vld [vmem:[#allocation4 + $0x90] sm:$0xff]
  %v963 = vld [vmem:[#allocation4 + $0x98] sm:$0xff]
  %v964 = vld [vmem:[#allocation4 + $0xa0] sm:$0xff]
  %v965 = vld [vmem:[#allocation4 + $0xa8] sm:$0xff]
  %v966 = vld [vmem:[#allocation4 + $0xb0] sm:$0xff]
  %v967 = vld [vmem:[#allocation4 + $0xb8] sm:$0xff]
  %v968 = vld [vmem:[#allocation4 + $0xc0] sm:$0xff]
  %v969 = vld [vmem:[#allocation4 + $0xc8] sm:$0xff]
  %v970 = vld [vmem:[#allocation4 + $0xd0] sm:$0xff]
  %v971 = vld [vmem:[#allocation4 + $0xd8] sm:$0xff]
  %v972 = vld [vmem:[#allocation4 + $0xe0] sm:$0xff]
  %v973 = vld [vmem:[#allocation4 + $0xe8] sm:$0xff]
  %v974 = vld [vmem:[#allocation4 + $0xf0] sm:$0xff]
  %v975 = vld [vmem:[#allocation4 + $0xf8] sm:$0xff]
  %v976 = vld [vmem:[#allocation4 + $0x100] sm:$0xff]
  %v977 = vld [vmem:[#allocation4 + $0x108] sm:$0xff]
  %v978 = vld [vmem:[#allocation4 + $0x110] sm:$0xff]
  %v979 = vld [vmem:[#allocation4 + $0x118] sm:$0xff]
  %vm980 = vcmask 588800
  %v982 = vsel %vm980, %v943, 0
  %984 = vmatprep.subr.mxu0 0.0
  %985 = vmatpush1.msra.mxu0 0.0
  %986 = vmatprep.subr.mxu0 0.0
  %987 = vmatpush1.msra.mxu0 0.0
  %988 = vmatprep.subr.mxu0 0.0
  %989 = vmatpush1.msra.mxu0 0.0
  %990 = vmatprep.subr.mxu0 0.0
  %991 = vmatpush1.msra.mxu0 0.0
  %992 = vmatprep.subr.mxu0 0.0
  %993 = vmatpush1.msra.mxu0 0.0
  %994 = vmatprep.subr.mxu0 0.0
  %995 = vmatpush1.msra.mxu0 0.0
  %996 = vmatprep.subr.mxu0 0.0
  %997 = vmatpush1.msra.mxu0 0.0
  %998 = vmatprep.subr.mxu0 %v977
  %999 = vmatpush1.msra.mxu0 %v976
  %1000 = vmatprep.subr.mxu0 %v973
  %1001 = vmatpush1.msra.mxu0 %v972
  %1002 = vmatprep.subr.mxu0 %v969
  %1003 = vmatpush1.msra.mxu0 %v968
  %1004 = vmatprep.subr.mxu0 %v965
  %1005 = vmatpush1.msra.mxu0 %v964
  %1006 = vmatprep.subr.mxu0 %v961
  %1007 = vmatpush1.msra.mxu0 %v960
  %1008 = vmatprep.subr.mxu0 %v957
  %1009 = vmatpush1.msra.mxu0 %v956
  %1010 = vmatprep.subr.mxu0 %v953
  %1011 = vmatpush1.msra.mxu0 %v952
  %1012 = vmatprep.subr.mxu0 %v949
  %1013 = vmatpush1.msra.mxu0 %v948
  %1014 = vmatprep.subr.mxu0 %v945
  %1015 = vmatpush1.msra.mxu0 %v944
  %1016 = vmatprep.subr.mxu0 0.0
  %1017 = vmatpush2.msra.mxu0 0.0
  %1018 = vmatprep.subr.mxu0 0.0
  %1019 = vmatpush2.msra.mxu0 0.0
  %1020 = vmatprep.subr.mxu0 0.0
  %1021 = vmatpush2.msra.mxu0 0.0
  %1022 = vmatprep.subr.mxu0 0.0
  %1023 = vmatpush2.msra.mxu0 0.0
  %1024 = vmatprep.subr.mxu0 0.0
  %1025 = vmatpush2.msra.mxu0 0.0
  %1026 = vmatprep.subr.mxu0 0.0
  %1027 = vmatpush2.msra.mxu0 0.0
  %1028 = vmatprep.subr.mxu0 0.0
  %1029 = vmatpush2.msra.mxu0 0.0
  %1030 = vmatprep.subr.mxu0 0.0
  %1031 = vmatpush2.msra.mxu0 0.0
  %1032 = vmatprep.subr.mxu0 0.0
  %1033 = vmatpush2.msra.mxu0 0.0
  %1034 = vmatprep.subr.mxu0 0.0
  %1035 = vmatpush2.msra.mxu0 0.0
  %1036 = vmatprep.subr.mxu0 0.0
  %1037 = vmatpush2.msra.mxu0 0.0
  %1038 = vmatprep.subr.mxu0 0.0
  %1039 = vmatpush2.msra.mxu0 0.0
  %1040 = vmatprep.subr.mxu0 0.0
  %1041 = vmatpush2.msra.mxu0 0.0
  %1042 = vmatprep.subr.mxu0 0.0
  %1043 = vmatpush2.msra.mxu0 0.0
  %1044 = vmatprep.subr.mxu0 0.0
  %1045 = vmatpush2.msra.mxu0 0.0
  %1046 = vmatprep.subr.mxu0 0.0
  %1047 = vmatpush2.msra.mxu0 0.0
  %1048 = vmatprep.mubr.f32.mxu0 0.0
  %1049 = vmatmul.mubr.f32.gmra.mxu0 %v982
  %v1050 = vpop.f32.mrf.mxu0
  %v1051 = vadd.f32 0.0, %v1050
  %v1052 = vpop.f32.mrf.mxu0
  %v1053 = vadd.f32 0.0, %v1052
  %1054 = vdwg.mxu0
  %1055 = vmatprep.subr.mxu0 0.0
  %1056 = vmatpush1.msra.mxu0 0.0
  %1057 = vmatprep.subr.mxu0 0.0
  %1058 = vmatpush1.msra.mxu0 0.0
  %1059 = vmatprep.subr.mxu0 0.0
  %1060 = vmatpush1.msra.mxu0 0.0
  %1061 = vmatprep.subr.mxu0 0.0
  %1062 = vmatpush1.msra.mxu0 0.0
  %1063 = vmatprep.subr.mxu0 0.0
  %1064 = vmatpush1.msra.mxu0 0.0
  %1065 = vmatprep.subr.mxu0 0.0
  %1066 = vmatpush1.msra.mxu0 0.0
  %1067 = vmatprep.subr.mxu0 0.0
  %1068 = vmatpush1.msra.mxu0 0.0
  %1069 = vmatprep.subr.mxu0 %v979
  %1070 = vmatpush1.msra.mxu0 %v978
  %1071 = vmatprep.subr.mxu0 %v975
  %1072 = vmatpush1.msra.mxu0 %v974
  %1073 = vmatprep.subr.mxu0 %v971
  %1074 = vmatpush1.msra.mxu0 %v970
  %1075 = vmatprep.subr.mxu0 %v967
  %1076 = vmatpush1.msra.mxu0 %v966
  %1077 = vmatprep.subr.mxu0 %v963
  %1078 = vmatpush1.msra.mxu0 %v962
  %1079 = vmatprep.subr.mxu0 %v959
  %1080 = vmatpush1.msra.mxu0 %v958
  %1081 = vmatprep.subr.mxu0 %v955
  %1082 = vmatpush1.msra.mxu0 %v954
  %1083 = vmatprep.subr.mxu0 %v951
  %1084 = vmatpush1.msra.mxu0 %v950
  %1085 = vmatprep.subr.mxu0 %v947
  %1086 = vmatpush1.msra.mxu0 %v946
  %1087 = vmatprep.subr.mxu0 0.0
  %1088 = vmatpush2.msra.mxu0 0.0
  %1089 = vmatprep.subr.mxu0 0.0
  %1090 = vmatpush2.msra.mxu0 0.0
  %1091 = vmatprep.subr.mxu0 0.0
  %1092 = vmatpush2.msra.mxu0 0.0
  %1093 = vmatprep.subr.mxu0 0.0
  %1094 = vmatpush2.msra.mxu0 0.0
  %1095 = vmatprep.subr.mxu0 0.0
  %1096 = vmatpush2.msra.mxu0 0.0
  %1097 = vmatprep.subr.mxu0 0.0
  %1098 = vmatpush2.msra.mxu0 0.0
  %1099 = vmatprep.subr.mxu0 0.0
  %1100 = vmatpush2.msra.mxu0 0.0
  %1101 = vmatprep.subr.mxu0 0.0
  %1102 = vmatpush2.msra.mxu0 0.0
  %1103 = vmatprep.subr.mxu0 0.0
  %1104 = vmatpush2.msra.mxu0 0.0
  %1105 = vmatprep.subr.mxu0 0.0
  %1106 = vmatpush2.msra.mxu0 0.0
  %1107 = vmatprep.subr.mxu0 0.0
  %1108 = vmatpush2.msra.mxu0 0.0
  %1109 = vmatprep.subr.mxu0 0.0
  %1110 = vmatpush2.msra.mxu0 0.0
  %1111 = vmatprep.subr.mxu0 0.0
  %1112 = vmatpush2.msra.mxu0 0.0
  %1113 = vmatprep.subr.mxu0 0.0
  %1114 = vmatpush2.msra.mxu0 0.0
  %1115 = vmatprep.subr.mxu0 0.0
  %1116 = vmatpush2.msra.mxu0 0.0
  %1117 = vmatprep.subr.mxu0 0.0
  %1118 = vmatpush2.msra.mxu0 0.0
  %1119 = vmatprep.mubr.f32.mxu0 0.0
  %1120 = vmatmul.mubr.f32.gmra.mxu0 %v982
  %v1121 = vpop.f32.mrf.mxu0
  %v1122 = vadd.f32 0.0, %v1121
  %v1123 = vpop.f32.mrf.mxu0
  %v1124 = vadd.f32 0.0, %v1123
  %1125 = vdwg.mxu0
  %vm1126 = vcmask 1043456
  %v1127 = vsel %vm1126, %v1051, 0.0
  %v1128 = vsel %vm1126, %v1053, 0.0
  %v1129 = vadd.f32 %v1127, %v1128
  %v1130 = vsel %vm1126, %v1122, 0.0
  %v1131 = vadd.f32 %v1129, %v1130
  %v1132 = vsel %vm1126, %v1124, 0.0
  %v1133 = vadd.f32 %v1131, %v1132
  %1134 = vadd.xlane.f32.xlu0 %v1133
  %v1135 = vpop.xlane.xlu0 %1134
  %v1136 = vrcp.pop 512.0
  %v1137 = vmul.f32 %v1135, %v1136
  %v1138 = vsub.f32 %v1051, %v1137
  %v1139 = vsub.f32 %v1053, %v1137
  %v1140 = vsub.f32 %v1122, %v1137
  %v1141 = vsub.f32 %v1124, %v1137
  %v1142 = vmul.f32 %v1138, %v1138
  %v1143 = vmul.f32 %v1139, %v1139
  %v1144 = vmul.f32 %v1140, %v1140
  %v1145 = vmul.f32 %v1141, %v1141
  %v1146 = vsel %vm1126, %v1142, 0.0
  %v1147 = vsel %vm1126, %v1143, 0.0
  %v1148 = vadd.f32 %v1146, %v1147
  %v1149 = vsel %vm1126, %v1144, 0.0
  %v1150 = vadd.f32 %v1148, %v1149
  %v1151 = vsel %vm1126, %v1145, 0.0
  %v1152 = vadd.f32 %v1150, %v1151
  %1153 = vadd.xlane.f32.xlu0 %v1152
  %v1154 = vpop.xlane.xlu0 %1153
  %v1155 = vmul.f32 %v1154, %v1136
  %v1156 = vadd.f32 %v1155, 1e-05
  %v1157 = vrsqrt.pop %v1156
  %v1158 = vmul.f32 %v1138, %v1157
  %v1159 = vmul.f32 %v1139, %v1157
  %v1160 = vmul.f32 %v1140, %v1157
  %v1161 = vmul.f32 %v1141, %v1157
  %v1162 = vld [vmem:[%s5] sm:$0xf]
  %1164 = vset.pattern.permute.xlu0 0
  %1165 = vperm.xlu0 %1164, %v1162
  %v1166 = vpop.permute.xlu0 %1165
  %v1168 = vmul.f32 %v1158, %v1166
  %v1169 = vmul.f32 %v1159, %v1166
  %v1170 = vmul.f32 %v1160, %v1166
  %v1171 = vmul.f32 %v1161, %v1166
  %v1172 = vld [vmem:[%s6] sm:$0xf]
  %1174 = vset.pattern.permute.xlu0 0
  %1175 = vperm.xlu0 %1174, %v1172
  %v1176 = vpop.permute.xlu0 %1175
  %v1178 = vadd.f32 %v1168, %v1176
  %v1179 = vadd.f32 %v1169, %v1176
  %v1180 = vadd.f32 %v1170, %v1176
  %v1181 = vadd.f32 %v1171, %v1176
  %v1182 = vmax.f32 %v1178, 0.0
  %v1183 = vmax.f32 %v1179, 0.0
  %v1184 = vmax.f32 %v1180, 0.0
  %v1185 = vmax.f32 %v1181, 0.0
  %1186 = vst [vmem:[#allocation3] sm:$0xff] 0.0
  %1187 = vst [vmem:[#allocation3 + $0x8] sm:$0xff] 0.0
  %vm1188 = vcmask 273408
  %1189 = vst.msk [vmem:[#allocation3 + $0x10] sm:$0xf] %vm1188, 0.0
  %v1194 = vcombine.low %v1182, %v1183
  %v1195 = vcombine.low %v1184, %v1185
  %1196 = vrot.lane.b32.xlu0 %v1194, 17
  %v1197 = vpop.permute.xlu0 %1196
  %1198 = vrot.lane.b32.xlu0 %v1195, 17
  %v1199 = vpop.permute.xlu0 %1198
  %v1200 = vrot.slane %v1197, 4
  %v1201 = vrot.slane %v1199, 4
  %v1202 = vsel %vm270, %v1200, %v1197
  %v1203 = vsel %vm1126, %v1200, %v1201
  %v1204 = vsel %vm270, %v1203, %v1199
  %vm1208 = vcmask 1047556
  %vm1209 = vmor %vm1208, %vm279
  %1210 = vst.msk [vmem:[#allocation3] sm:$0xff] %vm1209, %v1202
  %1211 = vst [vmem:[#allocation3 + $0x8] sm:$0xff] %v1204
  %1212 = vst.msk [vmem:[#allocation3 + $0x10] sm:$0xf] %vm284, %v1201
  %v1213 = vld [vmem:[#allocation3] sm:$0xff]
  %v1214 = vld [vmem:[#allocation3 + $0x8] sm:$0xff]
  %v1219 = vcombine.low %v324, %v328
  %v1220 = vcombine.low %v332, %v336
  %v1223 = vmul.f32 %v1213, %v1219
  %v1224 = vmul.f32 %v1214, %v1220
  %v1227 = vcombine.high %v1223, %v1223
  %v1228 = vcombine.high %v1224, %v1224
  %1231 = vst [vmem:[#allocation5] sm:$0xf] %v1223
  %1232 = vst [vmem:[#allocation5 + $0x8] sm:$0xf] %v1227
  %1233 = vst [vmem:[#allocation5 + $0x10] sm:$0xf] %v1224
  %1234 = vst [vmem:[#allocation5 + $0x18] sm:$0xf] %v1228
  %v1235 = vld [vmem:[#allocation3] sm:$0xff]
  %v1236 = vld [vmem:[#allocation3 + $0x8] sm:$0xff]
  %v1237 = vld [vmem:[#allocation3 + $0x10] sm:$0xf]
  %v1238 = vcombine.low %v353, %v357
  %v1239 = vcombine.low %v361, %v365
  %1240 = vrot.lane.b32.xlu0 %v1238, 1
  %v1241 = vpop.permute.xlu0 %1240
  %1242 = vrot.lane.b32.xlu0 %v1239, 1
  %v1243 = vpop.permute.xlu0 %1242
  %v1244 = vrot.slane %v1241, 4
  %v1245 = vrot.slane %v1243, 4
  %v1246 = vsel %vm378, %v1244, %v1241
  %v1247 = vsel %vm1126, %v1244, %v1245
  %v1248 = vsel %vm378, %v1247, %v1243
  %v1252 = vmul.f32 %v1235, %v1246
  %v1253 = vmul.f32 %v1236, %v1248
  %v1254 = vmul.f32 %v1237, %v1245
  %v1258 = vcombine.low %v1252, %v1252
  %v1259 = vcombine.low %v1253, %v1253
  %v1260 = vcombine.low %v1254, %v1254
  %1261 = vrot.lane.b32.xlu0 %v1258, 127
  %v1262 = vpop.permute.xlu0 %1261
  %1263 = vrot.lane.b32.xlu0 %v1252, 127
  %v1264 = vpop.permute.xlu0 %1263
  %1265 = vrot.lane.b32.xlu0 %v1259, 127
  %v1266 = vpop.permute.xlu0 %1265
  %1267 = vrot.lane.b32.xlu0 %v1253, 127
  %v1268 = vpop.permute.xlu0 %1267
  %1269 = vrot.lane.b32.xlu0 %v1260, 127
  %v1270 = vpop.permute.xlu0 %1269
  %v1271 = vsel %vm407, %v1262, %v1264
  %v1272 = vsel %vm407, %v1264, %v1266
  %v1273 = vsel %vm407, %v1266, %v1268
  %v1274 = vsel %vm407, %v1268, %v1270
  %1279 = vst [vmem:[#allocation5] sm:$0xf0] %v1271
  %1280 = vst [vmem:[#allocation5 + $0x8] sm:$0xf0] %v1272
  %1281 = vst [vmem:[#allocation5 + $0x10] sm:$0xf0] %v1273
  %1282 = vst [vmem:[#allocation5 + $0x18] sm:$0xf0] %v1274
  %v1283 = vld [vmem:[#allocation3] sm:$0xff]
  %v1284 = vld [vmem:[#allocation3 + $0x8] sm:$0xff]
  %v1285 = vld [vmem:[#allocation3 + $0x10] sm:$0xf]
  %v1286 = vcombine.low %v428, %v432
  %v1287 = vcombine.low %v436, %v440
  %1288 = vrot.lane.b32.xlu0 %v1286, 2
  %v1289 = vpop.permute.xlu0 %1288
  %1290 = vrot.lane.b32.xlu0 %v1287, 2
  %v1291 = vpop.permute.xlu0 %1290
  %v1292 = vrot.slane %v1289, 4
  %v1293 = vrot.slane %v1291, 4
  %v1294 = vsel %vm453, %v1292, %v1289
  %v1295 = vsel %vm1126, %v1292, %v1293
  %v1296 = vsel %vm453, %v1295, %v1291
  %v1300 = vmul.f32 %v1283, %v1294
  %v1301 = vmul.f32 %v1284, %v1296
  %v1302 = vmul.f32 %v1285, %v1293
  %v1306 = vcombine.high %v1300, %v1300
  %v1307 = vcombine.high %v1301, %v1301
  %1308 = vrot.lane.b32.xlu0 %v1300, 126
  %v1309 = vpop.permute.xlu0 %1308
  %1310 = vrot.lane.b32.xlu0 %v1306, 126
  %v1311 = vpop.permute.xlu0 %1310
  %1312 = vrot.lane.b32.xlu0 %v1301, 126
  %v1313 = vpop.permute.xlu0 %1312
  %1314 = vrot.lane.b32.xlu0 %v1307, 126
  %v1315 = vpop.permute.xlu0 %1314
  %1316 = vrot.lane.b32.xlu0 %v1302, 126
  %v1317 = vpop.permute.xlu0 %1316
  %v1318 = vsel %vm482, %v1309, %v1311
  %v1319 = vsel %vm482, %v1311, %v1313
  %v1320 = vsel %vm482, %v1313, %v1315
  %v1321 = vsel %vm482, %v1315, %v1317
  %1326 = vst [vmem:[#allocation5 + $0x20] sm:$0xf] %v1318
  %1327 = vst [vmem:[#allocation5 + $0x28] sm:$0xf] %v1319
  %1328 = vst [vmem:[#allocation5 + $0x30] sm:$0xf] %v1320
  %1329 = vst [vmem:[#allocation5 + $0x38] sm:$0xf] %v1321
  %v1330 = vld [vmem:[#allocation3] sm:$0xff]
  %v1331 = vld [vmem:[#allocation3 + $0x8] sm:$0xff]
  %v1332 = vld [vmem:[#allocation3 + $0x10] sm:$0xf]
  %v1333 = vcombine.low %v503, %v507
  %v1334 = vcombine.low %v511, %v515
  %1335 = vrot.lane.b32.xlu0 %v1333, 16
  %v1336 = vpop.permute.xlu0 %1335
  %1337 = vrot.lane.b32.xlu0 %v1334, 16
  %v1338 = vpop.permute.xlu0 %1337
  %v1339 = vrot.slane %v1336, 4
  %v1340 = vrot.slane %v1338, 4
  %v1341 = vsel %vm528, %v1339, %v1336
  %v1342 = vsel %vm1126, %v1339, %v1340
  %v1343 = vsel %vm528, %v1342, %v1338
  %v1347 = vmul.f32 %v1330, %v1341
  %v1348 = vmul.f32 %v1331, %v1343
  %v1349 = vmul.f32 %v1332, %v1340
  %v1353 = vcombine.low %v1347, %v1347
  %v1354 = vcombine.low %v1348, %v1348
  %v1355 = vcombine.low %v1349, %v1349
  %1356 = vrot.lane.b32.xlu0 %v1353, 112
  %v1357 = vpop.permute.xlu0 %1356
  %1358 = vrot.lane.b32.xlu0 %v1347, 112
  %v1359 = vpop.permute.xlu0 %1358
  %1360 = vrot.lane.b32.xlu0 %v1354, 112
  %v1361 = vpop.permute.xlu0 %1360
  %1362 = vrot.lane.b32.xlu0 %v1348, 112
  %v1363 = vpop.permute.xlu0 %1362
  %1364 = vrot.lane.b32.xlu0 %v1355, 112
  %v1365 = vpop.permute.xlu0 %1364
  %v1366 = vsel %vm557, %v1357, %v1359
  %v1367 = vsel %vm557, %v1359, %v1361
  %v1368 = vsel %vm557, %v1361, %v1363
  %v1369 = vsel %vm557, %v1363, %v1365
  %1374 = vst [vmem:[#allocation5 + $0x20] sm:$0xf0] %v1366
  %1375 = vst [vmem:[#allocation5 + $0x28] sm:$0xf0] %v1367
  %1376 = vst [vmem:[#allocation5 + $0x30] sm:$0xf0] %v1368
  %1377 = vst [vmem:[#allocation5 + $0x38] sm:$0xf0] %v1369
  %v1378 = vld [vmem:[#allocation3] sm:$0xff]
  %v1379 = vld [vmem:[#allocation3 + $0x8] sm:$0xff]
  %v1380 = vld [vmem:[#allocation3 + $0x10] sm:$0xf]
  %v1381 = vcombine.low %v578, %v582
  %v1382 = vcombine.low %v586, %v590
  %1383 = vrot.lane.b32.xlu0 %v1381, 17
  %v1384 = vpop.permute.xlu0 %1383
  %1385 = vrot.lane.b32.xlu0 %v1382, 17
  %v1386 = vpop.permute.xlu0 %1385
  %v1387 = vrot.slane %v1384, 4
  %v1388 = vrot.slane %v1386, 4
  %v1389 = vsel %vm270, %v1387, %v1384
  %v1390 = vsel %vm1126, %v1387, %v1388
  %v1391 = vsel %vm270, %v1390, %v1386
  %v1395 = vmul.f32 %v1378, %v1389
  %v1396 = vmul.f32 %v1379, %v1391
  %v1397 = vmul.f32 %v1380, %v1388
  %v1401 = vcombine.high %v1395, %v1395
  %v1402 = vcombine.high %v1396, %v1396
  %1403 = vrot.lane.b32.xlu0 %v1395, 111
  %v1404 = vpop.permute.xlu0 %1403
  %1405 = vrot.lane.b32.xlu0 %v1401, 111
  %v1406 = vpop.permute.xlu0 %1405
  %1407 = vrot.lane.b32.xlu0 %v1396, 111
  %v1408 = vpop.permute.xlu0 %1407
  %1409 = vrot.lane.b32.xlu0 %v1402, 111
  %v1410 = vpop.permute.xlu0 %1409
  %1411 = vrot.lane.b32.xlu0 %v1397, 111
  %v1412 = vpop.permute.xlu0 %1411
  %v1413 = vsel %vm631, %v1404, %v1406
  %v1414 = vsel %vm631, %v1406, %v1408
  %v1415 = vsel %vm631, %v1408, %v1410
  %v1416 = vsel %vm631, %v1410, %v1412
  %1421 = vst [vmem:[#allocation5 + $0x40] sm:$0xf] %v1413
  %1422 = vst [vmem:[#allocation5 + $0x48] sm:$0xf] %v1414
  %1423 = vst [vmem:[#allocation5 + $0x50] sm:$0xf] %v1415
  %1424 = vst [vmem:[#allocation5 + $0x58] sm:$0xf] %v1416
  %v1425 = vld [vmem:[#allocation3] sm:$0xff]
  %v1426 = vld [vmem:[#allocation3 + $0x8] sm:$0xff]
  %v1427 = vld [vmem:[#allocation3 + $0x10] sm:$0xf]
  %v1428 = vcombine.low %v652, %v656
  %v1429 = vcombine.low %v660, %v664
  %1430 = vrot.lane.b32.xlu0 %v1428, 18
  %v1431 = vpop.permute.xlu0 %1430
  %1432 = vrot.lane.b32.xlu0 %v1429, 18
  %v1433 = vpop.permute.xlu0 %1432
  %v1434 = vrot.slane %v1431, 4
  %v1435 = vrot.slane %v1433, 4
  %v1436 = vsel %vm677, %v1434, %v1431
  %v1437 = vsel %vm1126, %v1434, %v1435
  %v1438 = vsel %vm677, %v1437, %v1433
  %v1442 = vmul.f32 %v1425, %v1436
  %v1443 = vmul.f32 %v1426, %v1438
  %v1444 = vmul.f32 %v1427, %v1435
  %v1448 = vcombine.low %v1442, %v1442
  %v1449 = vcombine.low %v1443, %v1443
  %v1450 = vcombine.low %v1444, %v1444
  %1451 = vrot.lane.b32.xlu0 %v1448, 110
  %v1452 = vpop.permute.xlu0 %1451
  %1453 = vrot.lane.b32.xlu0 %v1442, 110
  %v1454 = vpop.permute.xlu0 %1453
  %1455 = vrot.lane.b32.xlu0 %v1449, 110
  %v1456 = vpop.permute.xlu0 %1455
  %1457 = vrot.lane.b32.xlu0 %v1443, 110
  %v1458 = vpop.permute.xlu0 %1457
  %1459 = vrot.lane.b32.xlu0 %v1450, 110
  %v1460 = vpop.permute.xlu0 %1459
  %v1461 = vsel %vm706, %v1452, %v1454
  %v1462 = vsel %vm706, %v1454, %v1456
  %v1463 = vsel %vm706, %v1456, %v1458
  %v1464 = vsel %vm706, %v1458, %v1460
  %1469 = vst [vmem:[#allocation5 + $0x40] sm:$0xf0] %v1461
  %1470 = vst [vmem:[#allocation5 + $0x48] sm:$0xf0] %v1462
  %1471 = vst [vmem:[#allocation5 + $0x50] sm:$0xf0] %v1463
  %1472 = vst [vmem:[#allocation5 + $0x58] sm:$0xf0] %v1464
  %v1473 = vld [vmem:[#allocation3] sm:$0xff]
  %v1474 = vld [vmem:[#allocation3 + $0x8] sm:$0xff]
  %v1475 = vld [vmem:[#allocation3 + $0x10] sm:$0xf]
  %v1476 = vcombine.low %v727, %v731
  %v1477 = vcombine.low %v735, %v739
  %1478 = vrot.lane.b32.xlu0 %v1476, 32
  %v1479 = vpop.permute.xlu0 %1478
  %1480 = vrot.lane.b32.xlu0 %v1477, 32
  %v1481 = vpop.permute.xlu0 %1480
  %v1482 = vrot.slane %v1479, 4
  %v1483 = vrot.slane %v1481, 4
  %v1484 = vsel %vm752, %v1482, %v1479
  %v1485 = vsel %vm1126, %v1482, %v1483
  %v1486 = vsel %vm752, %v1485, %v1481
  %v1490 = vmul.f32 %v1473, %v1484
  %v1491 = vmul.f32 %v1474, %v1486
  %v1492 = vmul.f32 %v1475, %v1483
  %v1496 = vcombine.high %v1490, %v1490
  %v1497 = vcombine.high %v1491, %v1491
  %1498 = vrot.lane.b32.xlu0 %v1490, 96
  %v1499 = vpop.permute.xlu0 %1498
  %1500 = vrot.lane.b32.xlu0 %v1496, 96
  %v1501 = vpop.permute.xlu0 %1500
  %1502 = vrot.lane.b32.xlu0 %v1491, 96
  %v1503 = vpop.permute.xlu0 %1502
  %1504 = vrot.lane.b32.xlu0 %v1497, 96
  %v1505 = vpop.permute.xlu0 %1504
  %1506 = vrot.lane.b32.xlu0 %v1492, 96
  %v1507 = vpop.permute.xlu0 %1506
  %v1508 = vsel %vm781, %v1499, %v1501
  %v1509 = vsel %vm781, %v1501, %v1503
  %v1510 = vsel %vm781, %v1503, %v1505
  %v1511 = vsel %vm781, %v1505, %v1507
  %1516 = vst [vmem:[#allocation5 + $0x60] sm:$0xf] %v1508
  %1517 = vst [vmem:[#allocation5 + $0x68] sm:$0xf] %v1509
  %1518 = vst [vmem:[#allocation5 + $0x70] sm:$0xf] %v1510
  %1519 = vst [vmem:[#allocation5 + $0x78] sm:$0xf] %v1511
  %v1520 = vld [vmem:[#allocation3] sm:$0xff]
  %v1521 = vld [vmem:[#allocation3 + $0x8] sm:$0xff]
  %v1522 = vld [vmem:[#allocation3 + $0x10] sm:$0xf]
  %v1523 = vcombine.low %v802, %v806
  %v1524 = vcombine.low %v810, %v814
  %1525 = vrot.lane.b32.xlu0 %v1523, 33
  %v1526 = vpop.permute.xlu0 %1525
  %1527 = vrot.lane.b32.xlu0 %v1524, 33
  %v1528 = vpop.permute.xlu0 %1527
  %v1529 = vrot.slane %v1526, 4
  %v1530 = vrot.slane %v1528, 4
  %v1531 = vsel %vm827, %v1529, %v1526
  %v1532 = vsel %vm1126, %v1529, %v1530
  %v1533 = vsel %vm827, %v1532, %v1528
  %v1537 = vmul.f32 %v1520, %v1531
  %v1538 = vmul.f32 %v1521, %v1533
  %v1539 = vmul.f32 %v1522, %v1530
  %v1543 = vcombine.low %v1537, %v1537
  %v1544 = vcombine.low %v1538, %v1538
  %v1545 = vcombine.low %v1539, %v1539
  %1546 = vrot.lane.b32.xlu0 %v1543, 95
  %v1547 = vpop.permute.xlu0 %1546
  %1548 = vrot.lane.b32.xlu0 %v1537, 95
  %v1549 = vpop.permute.xlu0 %1548
  %1550 = vrot.lane.b32.xlu0 %v1544, 95
  %v1551 = vpop.permute.xlu0 %1550
  %1552 = vrot.lane.b32.xlu0 %v1538, 95
  %v1553 = vpop.permute.xlu0 %1552
  %1554 = vrot.lane.b32.xlu0 %v1545, 95
  %v1555 = vpop.permute.xlu0 %1554
  %v1556 = vsel %vm856, %v1547, %v1549
  %v1557 = vsel %vm856, %v1549, %v1551
  %v1558 = vsel %vm856, %v1551, %v1553
  %v1559 = vsel %vm856, %v1553, %v1555
  %1564 = vst [vmem:[#allocation5 + $0x60] sm:$0xf0] %v1556
  %1565 = vst [vmem:[#allocation5 + $0x68] sm:$0xf0] %v1557
  %1566 = vst [vmem:[#allocation5 + $0x70] sm:$0xf0] %v1558
  %1567 = vst [vmem:[#allocation5 + $0x78] sm:$0xf0] %v1559
  %v1568 = vld [vmem:[#allocation3] sm:$0xff]
  %v1569 = vld [vmem:[#allocation3 + $0x8] sm:$0xff]
  %v1570 = vld [vmem:[#allocation3 + $0x10] sm:$0xf]
  %v1571 = vcombine.low %v877, %v881
  %v1572 = vcombine.low %v885, %v889
  %1573 = vrot.lane.b32.xlu0 %v1571, 34
  %v1574 = vpop.permute.xlu0 %1573
  %1575 = vrot.lane.b32.xlu0 %v1572, 34
  %v1576 = vpop.permute.xlu0 %1575
  %v1577 = vrot.slane %v1574, 4
  %v1578 = vrot.slane %v1576, 4
  %v1579 = vsel %vm47, %v1577, %v1574
  %v1580 = vsel %vm1126, %v1577, %v1578
  %v1581 = vsel %vm47, %v1580, %v1576
  %v1585 = vmul.f32 %v1568, %v1579
  %v1586 = vmul.f32 %v1569, %v1581
  %v1587 = vmul.f32 %v1570, %v1578
  %v1591 = vcombine.high %v1585, %v1585
  %v1592 = vcombine.high %v1586, %v1586
  %1593 = vrot.lane.b32.xlu0 %v1585, 94
  %v1594 = vpop.permute.xlu0 %1593
  %1595 = vrot.lane.b32.xlu0 %v1591, 94
  %v1596 = vpop.permute.xlu0 %1595
  %1597 = vrot.lane.b32.xlu0 %v1586, 94
  %v1598 = vpop.permute.xlu0 %1597
  %1599 = vrot.lane.b32.xlu0 %v1592, 94
  %v1600 = vpop.permute.xlu0 %1599
  %1601 = vrot.lane.b32.xlu0 %v1587, 94
  %v1602 = vpop.permute.xlu0 %1601
  %v1603 = vsel %vm930, %v1594, %v1596
  %v1604 = vsel %vm930, %v1596, %v1598
  %v1605 = vsel %vm930, %v1598, %v1600
  %v1606 = vsel %vm930, %v1600, %v1602
  %1611 = vst [vmem:[#allocation5 + $0x80] sm:$0xf] %v1603
  %1612 = vst [vmem:[#allocation5 + $0x88] sm:$0xf] %v1604
  %1613 = vst [vmem:[#allocation5 + $0x90] sm:$0xf] %v1605
  %1614 = vst [vmem:[#allocation5 + $0x98] sm:$0xf] %v1606
  %v1615 = vld [vmem:[%s7] sm:$0xf]
  %v1616 = vld [vmem:[#allocation5] sm:$0xff]
  %v1617 = vld [vmem:[#allocation5 + $0x8] sm:$0xff]
  %v1618 = vld [vmem:[#allocation5 + $0x10] sm:$0xff]
  %v1619 = vld [vmem:[#allocation5 + $0x18] sm:$0xff]
  %v1620 = vld [vmem:[#allocation5 + $0x20] sm:$0xff]
  %v1621 = vld [vmem:[#allocation5 + $0x28] sm:$0xff]
  %v1622 = vld [vmem:[#allocation5 + $0x30] sm:$0xff]
  %v1623 = vld [vmem:[#allocation5 + $0x38] sm:$0xff]
  %v1624 = vld [vmem:[#allocation5 + $0x40] sm:$0xff]
  %v1625 = vld [vmem:[#allocation5 + $0x48] sm:$0xff]
  %v1626 = vld [vmem:[#allocation5 + $0x50] sm:$0xff]
  %v1627 = vld [vmem:[#allocation5 + $0x58] sm:$0xff]
  %v1628 = vld [vmem:[#allocation5 + $0x60] sm:$0xff]
  %v1629 = vld [vmem:[#allocation5 + $0x68] sm:$0xff]
  %v1630 = vld [vmem:[#allocation5 + $0x70] sm:$0xff]
  %v1631 = vld [vmem:[#allocation5 + $0x78] sm:$0xff]
  %v1632 = vld [vmem:[#allocation5 + $0x80] sm:$0xf]
  %v1633 = vld [vmem:[#allocation5 + $0x88] sm:$0xf]
  %v1634 = vld [vmem:[#allocation5 + $0x90] sm:$0xf]
  %v1635 = vld [vmem:[#allocation5 + $0x98] sm:$0xf]
  %vm1636 = vcmask 293888
  %v1638 = vsel %vm1636, %v1615, 0
  %v1641 = vsel %vm1126, %v1632, 0
  %v1644 = vsel %vm1126, %v1633, 0
  %v1647 = vsel %vm1126, %v1634, 0
  %v1650 = vsel %vm1126, %v1635, 0
  %1652 = vmatprep.subr.mxu0 0.0
  %1653 = vmatpush1.msra.mxu0 0.0
  %1654 = vmatprep.subr.mxu0 0.0
  %1655 = vmatpush1.msra.mxu0 0.0
  %1656 = vmatprep.subr.mxu0 0.0
  %1657 = vmatpush1.msra.mxu0 0.0
  %1658 = vmatprep.subr.mxu0 0.0
  %1659 = vmatpush1.msra.mxu0 0.0
  %1660 = vmatprep.subr.mxu0 0.0
  %1661 = vmatpush1.msra.mxu0 0.0
  %1662 = vmatprep.subr.mxu0 0.0
  %1663 = vmatpush1.msra.mxu0 0.0
  %1664 = vmatprep.subr.mxu0 0.0
  %1665 = vmatpush1.msra.mxu0 0.0
  %1666 = vmatprep.subr.mxu0 0.0
  %1667 = vmatpush1.msra.mxu0 0.0
  %1668 = vmatprep.subr.mxu0 0.0
  %1669 = vmatpush1.msra.mxu0 0.0
  %1670 = vmatprep.subr.mxu0 0.0
  %1671 = vmatpush1.msra.mxu0 0.0
  %1672 = vmatprep.subr.mxu0 0.0
  %1673 = vmatpush1.msra.mxu0 0.0
  %1674 = vmatprep.subr.mxu0 %v1644
  %1675 = vmatpush1.msra.mxu0 %v1641
  %1676 = vmatprep.subr.mxu0 %v1629
  %1677 = vmatpush1.msra.mxu0 %v1628
  %1678 = vmatprep.subr.mxu0 %v1625
  %1679 = vmatpush1.msra.mxu0 %v1624
  %1680 = vmatprep.subr.mxu0 %v1621
  %1681 = vmatpush1.msra.mxu0 %v1620
  %1682 = vmatprep.subr.mxu0 %v1617
  %1683 = vmatpush1.msra.mxu0 %v1616
  %1684 = vmatprep.subr.mxu0 0.0
  %1685 = vmatpush2.msra.mxu0 0.0
  %1686 = vmatprep.subr.mxu0 0.0
  %1687 = vmatpush2.msra.mxu0 0.0
  %1688 = vmatprep.subr.mxu0 0.0
  %1689 = vmatpush2.msra.mxu0 0.0
  %1690 = vmatprep.subr.mxu0 0.0
  %1691 = vmatpush2.msra.mxu0 0.0
  %1692 = vmatprep.subr.mxu0 0.0
  %1693 = vmatpush2.msra.mxu0 0.0
  %1694 = vmatprep.subr.mxu0 0.0
  %1695 = vmatpush2.msra.mxu0 0.0
  %1696 = vmatprep.subr.mxu0 0.0
  %1697 = vmatpush2.msra.mxu0 0.0
  %1698 = vmatprep.subr.mxu0 0.0
  %1699 = vmatpush2.msra.mxu0 0.0
  %1700 = vmatprep.subr.mxu0 0.0
  %1701 = vmatpush2.msra.mxu0 0.0
  %1702 = vmatprep.subr.mxu0 0.0
  %1703 = vmatpush2.msra.mxu0 0.0
  %1704 = vmatprep.subr.mxu0 0.0
  %1705 = vmatpush2.msra.mxu0 0.0
  %1706 = vmatprep.subr.mxu0 0.0
  %1707 = vmatpush2.msra.mxu0 0.0
  %1708 = vmatprep.subr.mxu0 0.0
  %1709 = vmatpush2.msra.mxu0 0.0
  %1710 = vmatprep.subr.mxu0 0.0
  %1711 = vmatpush2.msra.mxu0 0.0
  %1712 = vmatprep.subr.mxu0 0.0
  %1713 = vmatpush2.msra.mxu0 0.0
  %1714 = vmatprep.subr.mxu0 0.0
  %1715 = vmatpush2.msra.mxu0 0.0
  %1716 = vmatprep.mubr.f32.mxu0 0.0
  %1717 = vmatmul.mubr.f32.gmra.mxu0 %v1638
  %v1718 = vpop.f32.mrf.mxu0
  %v1719 = vadd.f32 0.0, %v1718
  %v1720 = vpop.f32.mrf.mxu0
  %v1721 = vadd.f32 0.0, %v1720
  %1722 = vdwg.mxu0
  %1723 = vmatprep.subr.mxu0 0.0
  %1724 = vmatpush1.msra.mxu0 0.0
  %1725 = vmatprep.subr.mxu0 0.0
  %1726 = vmatpush1.msra.mxu0 0.0
  %1727 = vmatprep.subr.mxu0 0.0
  %1728 = vmatpush1.msra.mxu0 0.0
  %1729 = vmatprep.subr.mxu0 0.0
  %1730 = vmatpush1.msra.mxu0 0.0
  %1731 = vmatprep.subr.mxu0 0.0
  %1732 = vmatpush1.msra.mxu0 0.0
  %1733 = vmatprep.subr.mxu0 0.0
  %1734 = vmatpush1.msra.mxu0 0.0
  %1735 = vmatprep.subr.mxu0 0.0
  %1736 = vmatpush1.msra.mxu0 0.0
  %1737 = vmatprep.subr.mxu0 0.0
  %1738 = vmatpush1.msra.mxu0 0.0
  %1739 = vmatprep.subr.mxu0 0.0
  %1740 = vmatpush1.msra.mxu0 0.0
  %1741 = vmatprep.subr.mxu0 0.0
  %1742 = vmatpush1.msra.mxu0 0.0
  %1743 = vmatprep.subr.mxu0 0.0
  %1744 = vmatpush1.msra.mxu0 0.0
  %1745 = vmatprep.subr.mxu0 %v1650
  %1746 = vmatpush1.msra.mxu0 %v1647
  %1747 = vmatprep.subr.mxu0 %v1631
  %1748 = vmatpush1.msra.mxu0 %v1630
  %1749 = vmatprep.subr.mxu0 %v1627
  %1750 = vmatpush1.msra.mxu0 %v1626
  %1751 = vmatprep.subr.mxu0 %v1623
  %1752 = vmatpush1.msra.mxu0 %v1622
  %1753 = vmatprep.subr.mxu0 %v1619
  %1754 = vmatpush1.msra.mxu0 %v1618
  %1755 = vmatprep.subr.mxu0 0.0
  %1756 = vmatpush2.msra.mxu0 0.0
  %1757 = vmatprep.subr.mxu0 0.0
  %1758 = vmatpush2.msra.mxu0 0.0
  %1759 = vmatprep.subr.mxu0 0.0
  %1760 = vmatpush2.msra.mxu0 0.0
  %1761 = vmatprep.subr.mxu0 0.0
  %1762 = vmatpush2.msra.mxu0 0.0
  %1763 = vmatprep.subr.mxu0 0.0
  %1764 = vmatpush2.msra.mxu0 0.0
  %1765 = vmatprep.subr.mxu0 0.0
  %1766 = vmatpush2.msra.mxu0 0.0
  %1767 = vmatprep.subr.mxu0 0.0
  %1768 = vmatpush2.msra.mxu0 0.0
  %1769 = vmatprep.subr.mxu0 0.0
  %1770 = vmatpush2.msra.mxu0 0.0
  %1771 = vmatprep.subr.mxu0 0.0
  %1772 = vmatpush2.msra.mxu0 0.0
  %1773 = vmatprep.subr.mxu0 0.0
  %1774 = vmatpush2.msra.mxu0 0.0
  %1775 = vmatprep.subr.mxu0 0.0
  %1776 = vmatpush2.msra.mxu0 0.0
  %1777 = vmatprep.subr.mxu0 0.0
  %1778 = vmatpush2.msra.mxu0 0.0
  %1779 = vmatprep.subr.mxu0 0.0
  %1780 = vmatpush2.msra.mxu0 0.0
  %1781 = vmatprep.subr.mxu0 0.0
  %1782 = vmatpush2.msra.mxu0 0.0
  %1783 = vmatprep.subr.mxu0 0.0
  %1784 = vmatpush2.msra.mxu0 0.0
  %1785 = vmatprep.subr.mxu0 0.0
  %1786 = vmatpush2.msra.mxu0 0.0
  %1787 = vmatprep.mubr.f32.mxu0 0.0
  %1788 = vmatmul.mubr.f32.gmra.mxu0 %v1638
  %v1789 = vpop.f32.mrf.mxu0
  %v1790 = vadd.f32 0.0, %v1789
  %v1791 = vpop.f32.mrf.mxu0
  %v1792 = vadd.f32 0.0, %v1791
  %1793 = vdwg.mxu0
  %v1794 = vsel %vm1126, %v1719, 0.0
  %v1795 = vsel %vm1126, %v1721, 0.0
  %v1796 = vadd.f32 %v1794, %v1795
  %v1797 = vsel %vm1126, %v1790, 0.0
  %v1798 = vadd.f32 %v1796, %v1797
  %v1799 = vsel %vm1126, %v1792, 0.0
  %v1800 = vadd.f32 %v1798, %v1799
  %1801 = vadd.xlane.f32.xlu0 %v1800
  %v1802 = vpop.xlane.xlu0 %1801
  %v1803 = vmul.f32 %v1802, %v1136
  %v1804 = vsub.f32 %v1719, %v1803
  %v1805 = vsub.f32 %v1721, %v1803
  %v1806 = vsub.f32 %v1790, %v1803
  %v1807 = vsub.f32 %v1792, %v1803
  %v1808 = vmul.f32 %v1804, %v1804
  %v1809 = vmul.f32 %v1805, %v1805
  %v1810 = vmul.f32 %v1806, %v1806
  %v1811 = vmul.f32 %v1807, %v1807
  %v1812 = vsel %vm1126, %v1808, 0.0
  %v1813 = vsel %vm1126, %v1809, 0.0
  %v1814 = vadd.f32 %v1812, %v1813
  %v1815 = vsel %vm1126, %v1810, 0.0
  %v1816 = vadd.f32 %v1814, %v1815
  %v1817 = vsel %vm1126, %v1811, 0.0
  %v1818 = vadd.f32 %v1816, %v1817
  %1819 = vadd.xlane.f32.xlu0 %v1818
  %v1820 = vpop.xlane.xlu0 %1819
  %v1821 = vmul.f32 %v1820, %v1136
  %v1822 = vadd.f32 %v1821, 1e-05
  %v1823 = vrsqrt.pop %v1822
  %v1824 = vmul.f32 %v1804, %v1823
  %v1825 = vmul.f32 %v1805, %v1823
  %v1826 = vmul.f32 %v1806, %v1823
  %v1827 = vmul.f32 %v1807, %v1823
  %v1828 = vld [vmem:[%s8] sm:$0xf]
  %1830 = vset.pattern.permute.xlu0 0
  %1831 = vperm.xlu0 %1830, %v1828
  %v1832 = vpop.permute.xlu0 %1831
  %v1834 = vmul.f32 %v1824, %v1832
  %v1835 = vmul.f32 %v1825, %v1832
  %v1836 = vmul.f32 %v1826, %v1832
  %v1837 = vmul.f32 %v1827, %v1832
  %v1838 = vld [vmem:[%s9] sm:$0xf]
  %1840 = vset.pattern.permute.xlu0 0
  %1841 = vperm.xlu0 %1840, %v1838
  %v1842 = vpop.permute.xlu0 %1841
  %v1844 = vadd.f32 %v1834, %v1842
  %v1845 = vadd.f32 %v1835, %v1842
  %v1846 = vadd.f32 %v1836, %v1842
  %v1847 = vadd.f32 %v1837, %v1842
  %v1848 = vmax.f32 %v1844, 0.0
  %v1849 = vmax.f32 %v1845, 0.0
  %v1850 = vmax.f32 %v1846, 0.0
  %v1851 = vmax.f32 %v1847, 0.0
  %v1856 = vcombine.low %v1848, %v1849
  %v1857 = vcombine.low %v1850, %v1851
  %1860 = vst [vmem:[%s10] sm:$0xff] %v1856
  %1861 = vst [vmem:[%s10 + $0x8] sm:$0xff] %v1857
  // Predicated region
  $region42: #{up_forward.1} parent=0 // pred_check
    _
  $region43: #{up_forward.1} parent=0 // pred_check_branch
    %1863 = sbr.rel (0) target = $region45
  $region44: #{up_forward.1} parent=0 // pred_region
    _
  $region45: #{up_forward.1} parent=0 // pred_fallthru
    _
  // Predicated region
  $region46: #{up_forward.1} parent=0 // pred_check
    _
  $region47: #{up_forward.1} parent=0 // pred_check_branch
    %1865 = sbr.rel (0) target = $region49
  $region48: #{up_forward.1} parent=0 // pred_region
    _
  $region49: #{up_forward.1} parent=0 // pred_fallthru
    _

</llo_original>
